<compile_context>
chip_gen: v5e
topology: v5e:2x2
jax: 0.10.0
libtpu: 0.0.40
codegen_flags: <defaults>
</compile_context>

<pallas_src>
import functools

import jax
import jax.numpy as jnp
from jax.experimental import pallas as pl
from jax.experimental.pallas import tpu as pltpu


def _make_embed_kernel(token_block):
    def kernel(ids_ref, table_ref, out_ref, sems):
        # ids_ref   : (n_pad,)              int32, SMEM (scalar prefetch)
        # table_ref : (d_vocab, d_model)    f32,   HBM  (pl.ANY -- raw ref)
        # out_ref   : (token_block, d_model) f32,  VMEM output block
        # sems      : (token_block,) DMA semaphores
        base = pl.program_id(0) * token_block
        v = table_ref.shape[0]

        # Issue all row-gather DMAs for this block; they run concurrently and
        # land directly in the output block (gather == pure HBM-bound copy).
        for j in range(token_block):
            tok = ids_ref[base + j]
            tok = jnp.minimum(jnp.maximum(tok, 0), v - 1)  # clamp: no OOB DMA
            pltpu.make_async_copy(
                table_ref.at[pl.ds(tok, 1), :],
                out_ref.at[pl.ds(j, 1), :],
                sems.at[j],
            ).start()

        # Drain all row DMAs before the pipelined writeback of this block.
        for j in range(token_block):
            pltpu.make_async_copy(
                table_ref.at[pl.ds(0, 1), :],
                out_ref.at[pl.ds(j, 1), :],
                sems.at[j],
            ).wait()

    return kernel


@functools.partial(jax.jit, static_argnames=("token_block",))
def embed_lookup(tokens, table, *, token_block=64):
    """Gather rows of `table` ((d_vocab, d_model), i.e. W_E pre-transposed).

    tokens: integer array of token ids (any shape).
    Returns tokens.shape + (d_model,).
    """
    d_vocab, d_model = table.shape
    out_shape = tokens.shape + (d_model,)

    ids = tokens.reshape(-1).astype(jnp.int32)
    n = ids.shape[0]

    # Tokens gathered per grid step: multiple of 8 (sublane), capped at n.
    # Larger blocks amortize the ~0.35us per-step overhead and keep many row
    # DMAs in flight (hides per-DMA latency -> HBM-bandwidth bound).
    tb = max(8, min(int(token_block), n))
    tb = -(-tb // 8) * 8
    n_pad = pl.cdiv(n, tb) * tb
    if n_pad != n:
        # Pad the tail block; padded ids are 0 (valid) and sliced off below.
        ids = jnp.pad(ids, (0, n_pad - n))

    # TODO(synk): for very large batch*seq, block the ids through SMEM per grid
    # step instead of prefetching the whole id vector into SMEM at once.
    out_flat = pl.pallas_call(
        _make_embed_kernel(tb),
        out_shape=jax.ShapeDtypeStruct((n_pad, d_model), table.dtype),
        grid_spec=pltpu.PrefetchScalarGridSpec(
            num_scalar_prefetch=1,                          # token ids -> SMEM
            grid=(n_pad // tb,),
            in_specs=[pl.BlockSpec(memory_space=pl.ANY)],   # table stays in HBM
            out_specs=pl.BlockSpec((tb, d_model), lambda i, ids: (i, 0)),
            scratch_shapes=[pltpu.SemaphoreType.DMA((tb,))],
        ),
        compiler_params=pltpu.CompilerParams(
            dimension_semantics=("parallel",),              # v7x: split over 2 TCs
        ),
    )(ids, table)

    return out_flat[:n].reshape(out_shape)


def embed_forward(x, w_e, *, token_block=64):
    """Forward matching the PyTorch module signature: w_e is (d_model, d_vocab).

    Prefer storing the table pre-transposed ((d_vocab, d_model)) once and
    calling `embed_lookup` directly, so the transpose is not paid per call.
    """
    return embed_lookup(x, w_e.T, token_block=token_block)


if __name__ == "__main__":
    d_vocab, d_model = 64, 32
    batch, pos = 2, 8

    key = jax.random.PRNGKey(0)
    k_w, k_x = jax.random.split(key)

    # Parameter init matching nn.Parameter(randn(d_model, d_vocab) / sqrt(d_model)).
    w_e = (jax.random.normal(k_w, (d_model, d_vocab), dtype=jnp.float32)
           / jnp.sqrt(jnp.float32(d_model)))
    # Store the lookup table pre-transposed ONCE (row-gatherable layout); this
    # replaces the per-call w_e.T HBM copy of the previous version.
    table = jnp.asarray(w_e.T)                      # (d_vocab, d_model)

    x = jax.random.randint(k_x, (batch, pos), 0, d_vocab, dtype=jnp.int32)

    out = embed_lookup(x, table)
    out = jax.block_until_ready(out)

    # Reference: einsum('dbp->bpd', W_E[:, x]) == W_E.T[x]
    ref = w_e.T[x]
    assert out.shape == (batch, pos, d_model)
    assert jnp.array_equal(out, ref), "mismatch vs reference (embed_lookup)"

    # Also exercise the module-signature wrapper (w_e in native (D, V) layout).
    out2 = jax.block_until_ready(embed_forward(x, w_e))
    assert jnp.array_equal(out2, ref), "mismatch vs reference (embed_forward)"

    print("KERNEL_OK")
</pallas_src>

<mosaic_0001>
module attributes {stable_mosaic.version = 11 : i64} {
  func.func @kernel(%arg0: i32, %arg1: memref<16xi32, #tpu.memory_space<smem>>, %arg2: memref<64x32xf32, #tpu.memory_space<any>>, %arg3: memref<16x32xf32, #tpu.memory_space<vmem>>, %arg4: memref<16x!tpu.dma_semaphore, #tpu.memory_space<semaphore_mem>>) attributes {dimension_semantics = [#tpu.dimension_semantics<parallel>], iteration_bounds = array<i64: 1>, scalar_prefetch = 1 : i64, scratch_operands = 1 : i64, tpu.core_type = #tpu.core_type<tc>, window_params = [{}, {transform_indices = @transform_1, window_bounds = array<i64: 16, 32>}]} {
    %c16_i32 = arith.constant 16 : i32
    %0 = arith.muli %arg0, %c16_i32 : i32
    %c0_i32 = arith.constant 0 : i32
    %1 = arith.addi %0, %c0_i32 : i32
    %2 = arith.index_cast %1 : i32 to index
    %3 = memref.load %arg1[%2] : memref<16xi32, #tpu.memory_space<smem>>
    %c0_i32_0 = arith.constant 0 : i32
    %4 = arith.maxsi %3, %c0_i32_0 : i32
    %c63_i32 = arith.constant 63 : i32
    %5 = arith.minsi %4, %c63_i32 : i32
    %c0_i32_1 = arith.constant 0 : i32
    %c0_i32_2 = arith.constant 0 : i32
    %6 = tpu.memref_slice %arg2[%5, %c0_i32_2] : memref<64x32xf32, #tpu.memory_space<any>> -> memref<1x32xf32, #tpu.memory_space<any>>
    %c0_i32_3 = arith.constant 0 : i32
    %c0_i32_4 = arith.constant 0 : i32
    %7 = tpu.memref_slice %arg3[%c0_i32_3, %c0_i32_4] : memref<16x32xf32, #tpu.memory_space<vmem>> -> memref<1x32xf32, #tpu.memory_space<vmem>>
    %8 = tpu.memref_slice %arg4[%c0_i32_1] : memref<16x!tpu.dma_semaphore, #tpu.memory_space<semaphore_mem>> -> memref<1x!tpu.dma_semaphore, #tpu.memory_space<semaphore_mem>>
    %9 = tpu.memref_squeeze %8 : memref<1x!tpu.dma_semaphore, #tpu.memory_space<semaphore_mem>> -> memref<!tpu.dma_semaphore, #tpu.memory_space<semaphore_mem>>
    tpu.enqueue_dma source(%6 : memref<1x32xf32, #tpu.memory_space<any>>) target(%7 : memref<1x32xf32, #tpu.memory_space<vmem>>) target_semaphore(%9 : memref<!tpu.dma_semaphore, #tpu.memory_space<semaphore_mem>>)
    %c1_i32 = arith.constant 1 : i32
    %10 = arith.addi %0, %c1_i32 : i32
    %11 = arith.index_cast %10 : i32 to index
    %12 = memref.load %arg1[%11] : memref<16xi32, #tpu.memory_space<smem>>
    %c0_i32_5 = arith.constant 0 : i32
    %13 = arith.maxsi %12, %c0_i32_5 : i32
    %c63_i32_6 = arith.constant 63 : i32
    %14 = arith.minsi %13, %c63_i32_6 : i32
    %c1_i32_7 = arith.constant 1 : i32
    %c0_i32_8 = arith.constant 0 : i32
    %15 = tpu.memref_slice %arg2[%14, %c0_i32_8] : memref<64x32xf32, #tpu.memory_space<any>> -> memref<1x32xf32, #tpu.memory_space<any>>
    %c1_i32_9 = arith.constant 1 : i32
    %c0_i32_10 = arith.constant 0 : i32
    %16 = tpu.memref_slice %arg3[%c1_i32_9, %c0_i32_10] : memref<16x32xf32, #tpu.memory_space<vmem>> -> memref<1x32xf32, #tpu.memory_space<vmem>>
    %17 = tpu.memref_slice %arg4[%c1_i32_7] : memref<16x!tpu.dma_semaphore, #tpu.memory_space<semaphore_mem>> -> memref<1x!tpu.dma_semaphore, #tpu.memory_space<semaphore_mem>>
    %18 = tpu.memref_squeeze %17 : memref<1x!tpu.dma_semaphore, #tpu.memory_space<semaphore_mem>> -> memref<!tpu.dma_semaphore, #tpu.memory_space<semaphore_mem>>
    tpu.enqueue_dma source(%15 : memref<1x32xf32, #tpu.memory_space<any>>) target(%16 : memref<1x32xf32, #tpu.memory_space<vmem>>) target_semaphore(%18 : memref<!tpu.dma_semaphore, #tpu.memory_space<semaphore_mem>>)
    %c2_i32 = arith.constant 2 : i32
    %19 = arith.addi %0, %c2_i32 : i32
    %20 = arith.index_cast %19 : i32 to index
    %21 = memref.load %arg1[%20] : memref<16xi32, #tpu.memory_space<smem>>
    %c0_i32_11 = arith.constant 0 : i32
    %22 = arith.maxsi %21, %c0_i32_11 : i32
    %c63_i32_12 = arith.constant 63 : i32
    %23 = arith.minsi %22, %c63_i32_12 : i32
    %c2_i32_13 = arith.constant 2 : i32
    %c0_i32_14 = arith.constant 0 : i32
    %24 = tpu.memref_slice %arg2[%23, %c0_i32_14] : memref<64x32xf32, #tpu.memory_space<any>> -> memref<1x32xf32, #tpu.memory_space<any>>
    %c2_i32_15 = arith.constant 2 : i32
    %c0_i32_16 = arith.constant 0 : i32
    %25 = tpu.memref_slice %arg3[%c2_i32_15, %c0_i32_16] : memref<16x32xf32, #tpu.memory_space<vmem>> -> memref<1x32xf32, #tpu.memory_space<vmem>>
    %26 = tpu.memref_slice %arg4[%c2_i32_13] : memref<16x!tpu.dma_semaphore, #tpu.memory_space<semaphore_mem>> -> memref<1x!tpu.dma_semaphore, #tpu.memory_space<semaphore_mem>>
    %27 = tpu.memref_squeeze %26 : memref<1x!tpu.dma_semaphore, #tpu.memory_space<semaphore_mem>> -> memref<!tpu.dma_semaphore, #tpu.memory_space<semaphore_mem>>
    tpu.enqueue_dma source(%24 : memref<1x32xf32, #tpu.memory_space<any>>) target(%25 : memref<1x32xf32, #tpu.memory_space<vmem>>) target_semaphore(%27 : memref<!tpu.dma_semaphore, #tpu.memory_space<semaphore_mem>>)
    %c3_i32 = arith.constant 3 : i32
    %28 = arith.addi %0, %c3_i32 : i32
    %29 = arith.index_cast %28 : i32 to index
    %30 = memref.load %arg1[%29] : memref<16xi32, #tpu.memory_space<smem>>
    %c0_i32_17 = arith.constant 0 : i32
    %31 = arith.maxsi %30, %c0_i32_17 : i32
    %c63_i32_18 = arith.constant 63 : i32
    %32 = arith.minsi %31, %c63_i32_18 : i32
    %c3_i32_19 = arith.constant 3 : i32
    %c0_i32_20 = arith.constant 0 : i32
    %33 = tpu.memref_slice %arg2[%32, %c0_i32_20] : memref<64x32xf32, #tpu.memory_space<any>> -> memref<1x32xf32, #tpu.memory_space<any>>
    %c3_i32_21 = arith.constant 3 : i32
    %c0_i32_22 = arith.constant 0 : i32
    %34 = tpu.memref_slice %arg3[%c3_i32_21, %c0_i32_22] : memref<16x32xf32, #tpu.memory_space<vmem>> -> memref<1x32xf32, #tpu.memory_space<vmem>>
    %35 = tpu.memref_slice %arg4[%c3_i32_19] : memref<16x!tpu.dma_semaphore, #tpu.memory_space<semaphore_mem>> -> memref<1x!tpu.dma_semaphore, #tpu.memory_space<semaphore_mem>>
    %36 = tpu.memref_squeeze %35 : memref<1x!tpu.dma_semaphore, #tpu.memory_space<semaphore_mem>> -> memref<!tpu.dma_semaphore, #tpu.memory_space<semaphore_mem>>
    tpu.enqueue_dma source(%33 : memref<1x32xf32, #tpu.memory_space<any>>) target(%34 : memref<1x32xf32, #tpu.memory_space<vmem>>) target_semaphore(%36 : memref<!tpu.dma_semaphore, #tpu.memory_space<semaphore_mem>>)
    %c4_i32 = arith.constant 4 : i32
    %37 = arith.addi %0, %c4_i32 : i32
    %38 = arith.index_cast %37 : i32 to index
    %39 = memref.load %arg1[%38] : memref<16xi32, #tpu.memory_space<smem>>
    %c0_i32_23 = arith.constant 0 : i32
    %40 = arith.maxsi %39, %c0_i32_23 : i32
    %c63_i32_24 = arith.constant 63 : i32
    %41 = arith.minsi %40, %c63_i32_24 : i32
    %c4_i32_25 = arith.constant 4 : i32
    %c0_i32_26 = arith.constant 0 : i32
    %42 = tpu.memref_slice %arg2[%41, %c0_i32_26] : memref<64x32xf32, #tpu.memory_space<any>> -> memref<1x32xf32, #tpu.memory_space<any>>
    %c4_i32_27 = arith.constant 4 : i32
    %c0_i32_28 = arith.constant 0 : i32
    %43 = tpu.memref_slice %arg3[%c4_i32_27, %c0_i32_28] : memref<16x32xf32, #tpu.memory_space<vmem>> -> memref<1x32xf32, #tpu.memory_space<vmem>>
    %44 = tpu.memref_slice %arg4[%c4_i32_25] : memref<16x!tpu.dma_semaphore, #tpu.memory_space<semaphore_mem>> -> memref<1x!tpu.dma_semaphore, #tpu.memory_space<semaphore_mem>>
    %45 = tpu.memref_squeeze %44 : memref<1x!tpu.dma_semaphore, #tpu.memory_space<semaphore_mem>> -> memref<!tpu.dma_semaphore, #tpu.memory_space<semaphore_mem>>
    tpu.enqueue_dma source(%42 : memref<1x32xf32, #tpu.memory_space<any>>) target(%43 : memref<1x32xf32, #tpu.memory_space<vmem>>) target_semaphore(%45 : memref<!tpu.dma_semaphore, #tpu.memory_space<semaphore_mem>>)
    %c5_i32 = arith.constant 5 : i32
    %46 = arith.addi %0, %c5_i32 : i32
    %47 = arith.index_cast %46 : i32 to index
    %48 = memref.load %arg1[%47] : memref<16xi32, #tpu.memory_space<smem>>
    %c0_i32_29 = arith.constant 0 : i32
    %49 = arith.maxsi %48, %c0_i32_29 : i32
    %c63_i32_30 = arith.constant 63 : i32
    %50 = arith.minsi %49, %c63_i32_30 : i32
    %c5_i32_31 = arith.constant 5 : i32
    %c0_i32_32 = arith.constant 0 : i32
    %51 = tpu.memref_slice %arg2[%50, %c0_i32_32] : memref<64x32xf32, #tpu.memory_space<any>> -> memref<1x32xf32, #tpu.memory_space<any>>
    %c5_i32_33 = arith.constant 5 : i32
    %c0_i32_34 = arith.constant 0 : i32
    %52 = tpu.memref_slice %arg3[%c5_i32_33, %c0_i32_34] : memref<16x32xf32, #tpu.memory_space<vmem>> -> memref<1x32xf32, #tpu.memory_space<vmem>>
    %53 = tpu.memref_slice %arg4[%c5_i32_31] : memref<16x!tpu.dma_semaphore, #tpu.memory_space<semaphore_mem>> -> memref<1x!tpu.dma_semaphore, #tpu.memory_space<semaphore_mem>>
    %54 = tpu.memref_squeeze %53 : memref<1x!tpu.dma_semaphore, #tpu.memory_space<semaphore_mem>> -> memref<!tpu.dma_semaphore, #tpu.memory_space<semaphore_mem>>
    tpu.enqueue_dma source(%51 : memref<1x32xf32, #tpu.memory_space<any>>) target(%52 : memref<1x32xf32, #tpu.memory_space<vmem>>) target_semaphore(%54 : memref<!tpu.dma_semaphore, #tpu.memory_space<semaphore_mem>>)
    %c6_i32 = arith.constant 6 : i32
    %55 = arith.addi %0, %c6_i32 : i32
    %56 = arith.index_cast %55 : i32 to index
    %57 = memref.load %arg1[%56] : memref<16xi32, #tpu.memory_space<smem>>
    %c0_i32_35 = arith.constant 0 : i32
    %58 = arith.maxsi %57, %c0_i32_35 : i32
    %c63_i32_36 = arith.constant 63 : i32
    %59 = arith.minsi %58, %c63_i32_36 : i32
    %c6_i32_37 = arith.constant 6 : i32
    %c0_i32_38 = arith.constant 0 : i32
    %60 = tpu.memref_slice %arg2[%59, %c0_i32_38] : memref<64x32xf32, #tpu.memory_space<any>> -> memref<1x32xf32, #tpu.memory_space<any>>
    %c6_i32_39 = arith.constant 6 : i32
    %c0_i32_40 = arith.constant 0 : i32
    %61 = tpu.memref_slice %arg3[%c6_i32_39, %c0_i32_40] : memref<16x32xf32, #tpu.memory_space<vmem>> -> memref<1x32xf32, #tpu.memory_space<vmem>>
    %62 = tpu.memref_slice %arg4[%c6_i32_37] : memref<16x!tpu.dma_semaphore, #tpu.memory_space<semaphore_mem>> -> memref<1x!tpu.dma_semaphore, #tpu.memory_space<semaphore_mem>>
    %63 = tpu.memref_squeeze %62 : memref<1x!tpu.dma_semaphore, #tpu.memory_space<semaphore_mem>> -> memref<!tpu.dma_semaphore, #tpu.memory_space<semaphore_mem>>
    tpu.enqueue_dma source(%60 : memref<1x32xf32, #tpu.memory_space<any>>) target(%61 : memref<1x32xf32, #tpu.memory_space<vmem>>) target_semaphore(%63 : memref<!tpu.dma_semaphore, #tpu.memory_space<semaphore_mem>>)
    %c7_i32 = arith.constant 7 : i32
    %64 = arith.addi %0, %c7_i32 : i32
    %65 = arith.index_cast %64 : i32 to index
    %66 = memref.load %arg1[%65] : memref<16xi32, #tpu.memory_space<smem>>
    %c0_i32_41 = arith.constant 0 : i32
    %67 = arith.maxsi %66, %c0_i32_41 : i32
    %c63_i32_42 = arith.constant 63 : i32
    %68 = arith.minsi %67, %c63_i32_42 : i32
    %c7_i32_43 = arith.constant 7 : i32
    %c0_i32_44 = arith.constant 0 : i32
    %69 = tpu.memref_slice %arg2[%68, %c0_i32_44] : memref<64x32xf32, #tpu.memory_space<any>> -> memref<1x32xf32, #tpu.memory_space<any>>
    %c7_i32_45 = arith.constant 7 : i32
    %c0_i32_46 = arith.constant 0 : i32
    %70 = tpu.memref_slice %arg3[%c7_i32_45, %c0_i32_46] : memref<16x32xf32, #tpu.memory_space<vmem>> -> memref<1x32xf32, #tpu.memory_space<vmem>>
    %71 = tpu.memref_slice %arg4[%c7_i32_43] : memref<16x!tpu.dma_semaphore, #tpu.memory_space<semaphore_mem>> -> memref<1x!tpu.dma_semaphore, #tpu.memory_space<semaphore_mem>>
    %72 = tpu.memref_squeeze %71 : memref<1x!tpu.dma_semaphore, #tpu.memory_space<semaphore_mem>> -> memref<!tpu.dma_semaphore, #tpu.memory_space<semaphore_mem>>
    tpu.enqueue_dma source(%69 : memref<1x32xf32, #tpu.memory_space<any>>) target(%70 : memref<1x32xf32, #tpu.memory_space<vmem>>) target_semaphore(%72 : memref<!tpu.dma_semaphore, #tpu.memory_space<semaphore_mem>>)
    %c8_i32 = arith.constant 8 : i32
    %73 = arith.addi %0, %c8_i32 : i32
    %74 = arith.index_cast %73 : i32 to index
    %75 = memref.load %arg1[%74] : memref<16xi32, #tpu.memory_space<smem>>
    %c0_i32_47 = arith.constant 0 : i32
    %76 = arith.maxsi %75, %c0_i32_47 : i32
    %c63_i32_48 = arith.constant 63 : i32
    %77 = arith.minsi %76, %c63_i32_48 : i32
    %c8_i32_49 = arith.constant 8 : i32
    %c0_i32_50 = arith.constant 0 : i32
    %78 = tpu.memref_slice %arg2[%77, %c0_i32_50] : memref<64x32xf32, #tpu.memory_space<any>> -> memref<1x32xf32, #tpu.memory_space<any>>
    %c8_i32_51 = arith.constant 8 : i32
    %c0_i32_52 = arith.constant 0 : i32
    %79 = tpu.memref_slice %arg3[%c8_i32_51, %c0_i32_52] : memref<16x32xf32, #tpu.memory_space<vmem>> -> memref<1x32xf32, #tpu.memory_space<vmem>>
    %80 = tpu.memref_slice %arg4[%c8_i32_49] : memref<16x!tpu.dma_semaphore, #tpu.memory_space<semaphore_mem>> -> memref<1x!tpu.dma_semaphore, #tpu.memory_space<semaphore_mem>>
    %81 = tpu.memref_squeeze %80 : memref<1x!tpu.dma_semaphore, #tpu.memory_space<semaphore_mem>> -> memref<!tpu.dma_semaphore, #tpu.memory_space<semaphore_mem>>
    tpu.enqueue_dma source(%78 : memref<1x32xf32, #tpu.memory_space<any>>) target(%79 : memref<1x32xf32, #tpu.memory_space<vmem>>) target_semaphore(%81 : memref<!tpu.dma_semaphore, #tpu.memory_space<semaphore_mem>>)
    %c9_i32 = arith.constant 9 : i32
    %82 = arith.addi %0, %c9_i32 : i32
    %83 = arith.index_cast %82 : i32 to index
    %84 = memref.load %arg1[%83] : memref<16xi32, #tpu.memory_space<smem>>
    %c0_i32_53 = arith.constant 0 : i32
    %85 = arith.maxsi %84, %c0_i32_53 : i32
    %c63_i32_54 = arith.constant 63 : i32
    %86 = arith.minsi %85, %c63_i32_54 : i32
    %c9_i32_55 = arith.constant 9 : i32
    %c0_i32_56 = arith.constant 0 : i32
    %87 = tpu.memref_slice %arg2[%86, %c0_i32_56] : memref<64x32xf32, #tpu.memory_space<any>> -> memref<1x32xf32, #tpu.memory_space<any>>
    %c9_i32_57 = arith.constant 9 : i32
    %c0_i32_58 = arith.constant 0 : i32
    %88 = tpu.memref_slice %arg3[%c9_i32_57, %c0_i32_58] : memref<16x32xf32, #tpu.memory_space<vmem>> -> memref<1x32xf32, #tpu.memory_space<vmem>>
    %89 = tpu.memref_slice %arg4[%c9_i32_55] : memref<16x!tpu.dma_semaphore, #tpu.memory_space<semaphore_mem>> -> memref<1x!tpu.dma_semaphore, #tpu.memory_space<semaphore_mem>>
    %90 = tpu.memref_squeeze %89 : memref<1x!tpu.dma_semaphore, #tpu.memory_space<semaphore_mem>> -> memref<!tpu.dma_semaphore, #tpu.memory_space<semaphore_mem>>
    tpu.enqueue_dma source(%87 : memref<1x32xf32, #tpu.memory_space<any>>) target(%88 : memref<1x32xf32, #tpu.memory_space<vmem>>) target_semaphore(%90 : memref<!tpu.dma_semaphore, #tpu.memory_space<semaphore_mem>>)
    %c10_i32 = arith.constant 10 : i32
    %91 = arith.addi %0, %c10_i32 : i32
    %92 = arith.index_cast %91 : i32 to index
    %93 = memref.load %arg1[%92] : memref<16xi32, #tpu.memory_space<smem>>
    %c0_i32_59 = arith.constant 0 : i32
    %94 = arith.maxsi %93, %c0_i32_59 : i32
    %c63_i32_60 = arith.constant 63 : i32
    %95 = arith.minsi %94, %c63_i32_60 : i32
    %c10_i32_61 = arith.constant 10 : i32
    %c0_i32_62 = arith.constant 0 : i32
    %96 = tpu.memref_slice %arg2[%95, %c0_i32_62] : memref<64x32xf32, #tpu.memory_space<any>> -> memref<1x32xf32, #tpu.memory_space<any>>
    %c10_i32_63 = arith.constant 10 : i32
    %c0_i32_64 = arith.constant 0 : i32
    %97 = tpu.memref_slice %arg3[%c10_i32_63, %c0_i32_64] : memref<16x32xf32, #tpu.memory_space<vmem>> -> memref<1x32xf32, #tpu.memory_space<vmem>>
    %98 = tpu.memref_slice %arg4[%c10_i32_61] : memref<16x!tpu.dma_semaphore, #tpu.memory_space<semaphore_mem>> -> memref<1x!tpu.dma_semaphore, #tpu.memory_space<semaphore_mem>>
    %99 = tpu.memref_squeeze %98 : memref<1x!tpu.dma_semaphore, #tpu.memory_space<semaphore_mem>> -> memref<!tpu.dma_semaphore, #tpu.memory_space<semaphore_mem>>
    tpu.enqueue_dma source(%96 : memref<1x32xf32, #tpu.memory_space<any>>) target(%97 : memref<1x32xf32, #tpu.memory_space<vmem>>) target_semaphore(%99 : memref<!tpu.dma_semaphore, #tpu.memory_space<semaphore_mem>>)
    %c11_i32 = arith.constant 11 : i32
    %100 = arith.addi %0, %c11_i32 : i32
    %101 = arith.index_cast %100 : i32 to index
    %102 = memref.load %arg1[%101] : memref<16xi32, #tpu.memory_space<smem>>
    %c0_i32_65 = arith.constant 0 : i32
    %103 = arith.maxsi %102, %c0_i32_65 : i32
    %c63_i32_66 = arith.constant 63 : i32
    %104 = arith.minsi %103, %c63_i32_66 : i32
    %c11_i32_67 = arith.constant 11 : i32
    %c0_i32_68 = arith.constant 0 : i32
    %105 = tpu.memref_slice %arg2[%104, %c0_i32_68] : memref<64x32xf32, #tpu.memory_space<any>> -> memref<1x32xf32, #tpu.memory_space<any>>
    %c11_i32_69 = arith.constant 11 : i32
    %c0_i32_70 = arith.constant 0 : i32
    %106 = tpu.memref_slice %arg3[%c11_i32_69, %c0_i32_70] : memref<16x32xf32, #tpu.memory_space<vmem>> -> memref<1x32xf32, #tpu.memory_space<vmem>>
    %107 = tpu.memref_slice %arg4[%c11_i32_67] : memref<16x!tpu.dma_semaphore, #tpu.memory_space<semaphore_mem>> -> memref<1x!tpu.dma_semaphore, #tpu.memory_space<semaphore_mem>>
    %108 = tpu.memref_squeeze %107 : memref<1x!tpu.dma_semaphore, #tpu.memory_space<semaphore_mem>> -> memref<!tpu.dma_semaphore, #tpu.memory_space<semaphore_mem>>
    tpu.enqueue_dma source(%105 : memref<1x32xf32, #tpu.memory_space<any>>) target(%106 : memref<1x32xf32, #tpu.memory_space<vmem>>) target_semaphore(%108 : memref<!tpu.dma_semaphore, #tpu.memory_space<semaphore_mem>>)
    %c12_i32 = arith.constant 12 : i32
    %109 = arith.addi %0, %c12_i32 : i32
    %110 = arith.index_cast %109 : i32 to index
    %111 = memref.load %arg1[%110] : memref<16xi32, #tpu.memory_space<smem>>
    %c0_i32_71 = arith.constant 0 : i32
    %112 = arith.maxsi %111, %c0_i32_71 : i32
    %c63_i32_72 = arith.constant 63 : i32
    %113 = arith.minsi %112, %c63_i32_72 : i32
    %c12_i32_73 = arith.constant 12 : i32
    %c0_i32_74 = arith.constant 0 : i32
    %114 = tpu.memref_slice %arg2[%113, %c0_i32_74] : memref<64x32xf32, #tpu.memory_space<any>> -> memref<1x32xf32, #tpu.memory_space<any>>
    %c12_i32_75 = arith.constant 12 : i32
    %c0_i32_76 = arith.constant 0 : i32
    %115 = tpu.memref_slice %arg3[%c12_i32_75, %c0_i32_76] : memref<16x32xf32, #tpu.memory_space<vmem>> -> memref<1x32xf32, #tpu.memory_space<vmem>>
    %116 = tpu.memref_slice %arg4[%c12_i32_73] : memref<16x!tpu.dma_semaphore, #tpu.memory_space<semaphore_mem>> -> memref<1x!tpu.dma_semaphore, #tpu.memory_space<semaphore_mem>>
    %117 = tpu.memref_squeeze %116 : memref<1x!tpu.dma_semaphore, #tpu.memory_space<semaphore_mem>> -> memref<!tpu.dma_semaphore, #tpu.memory_space<semaphore_mem>>
    tpu.enqueue_dma source(%114 : memref<1x32xf32, #tpu.memory_space<any>>) target(%115 : memref<1x32xf32, #tpu.memory_space<vmem>>) target_semaphore(%117 : memref<!tpu.dma_semaphore, #tpu.memory_space<semaphore_mem>>)
    %c13_i32 = arith.constant 13 : i32
    %118 = arith.addi %0, %c13_i32 : i32
    %119 = arith.index_cast %118 : i32 to index
    %120 = memref.load %arg1[%119] : memref<16xi32, #tpu.memory_space<smem>>
    %c0_i32_77 = arith.constant 0 : i32
    %121 = arith.maxsi %120, %c0_i32_77 : i32
    %c63_i32_78 = arith.constant 63 : i32
    %122 = arith.minsi %121, %c63_i32_78 : i32
    %c13_i32_79 = arith.constant 13 : i32
    %c0_i32_80 = arith.constant 0 : i32
    %123 = tpu.memref_slice %arg2[%122, %c0_i32_80] : memref<64x32xf32, #tpu.memory_space<any>> -> memref<1x32xf32, #tpu.memory_space<any>>
    %c13_i32_81 = arith.constant 13 : i32
    %c0_i32_82 = arith.constant 0 : i32
    %124 = tpu.memref_slice %arg3[%c13_i32_81, %c0_i32_82] : memref<16x32xf32, #tpu.memory_space<vmem>> -> memref<1x32xf32, #tpu.memory_space<vmem>>
    %125 = tpu.memref_slice %arg4[%c13_i32_79] : memref<16x!tpu.dma_semaphore, #tpu.memory_space<semaphore_mem>> -> memref<1x!tpu.dma_semaphore, #tpu.memory_space<semaphore_mem>>
    %126 = tpu.memref_squeeze %125 : memref<1x!tpu.dma_semaphore, #tpu.memory_space<semaphore_mem>> -> memref<!tpu.dma_semaphore, #tpu.memory_space<semaphore_mem>>
    tpu.enqueue_dma source(%123 : memref<1x32xf32, #tpu.memory_space<any>>) target(%124 : memref<1x32xf32, #tpu.memory_space<vmem>>) target_semaphore(%126 : memref<!tpu.dma_semaphore, #tpu.memory_space<semaphore_mem>>)
    %c14_i32 = arith.constant 14 : i32
    %127 = arith.addi %0, %c14_i32 : i32
    %128 = arith.index_cast %127 : i32 to index
    %129 = memref.load %arg1[%128] : memref<16xi32, #tpu.memory_space<smem>>
    %c0_i32_83 = arith.constant 0 : i32
    %130 = arith.maxsi %129, %c0_i32_83 : i32
    %c63_i32_84 = arith.constant 63 : i32
    %131 = arith.minsi %130, %c63_i32_84 : i32
    %c14_i32_85 = arith.constant 14 : i32
    %c0_i32_86 = arith.constant 0 : i32
    %132 = tpu.memref_slice %arg2[%131, %c0_i32_86] : memref<64x32xf32, #tpu.memory_space<any>> -> memref<1x32xf32, #tpu.memory_space<any>>
    %c14_i32_87 = arith.constant 14 : i32
    %c0_i32_88 = arith.constant 0 : i32
    %133 = tpu.memref_slice %arg3[%c14_i32_87, %c0_i32_88] : memref<16x32xf32, #tpu.memory_space<vmem>> -> memref<1x32xf32, #tpu.memory_space<vmem>>
    %134 = tpu.memref_slice %arg4[%c14_i32_85] : memref<16x!tpu.dma_semaphore, #tpu.memory_space<semaphore_mem>> -> memref<1x!tpu.dma_semaphore, #tpu.memory_space<semaphore_mem>>
    %135 = tpu.memref_squeeze %134 : memref<1x!tpu.dma_semaphore, #tpu.memory_space<semaphore_mem>> -> memref<!tpu.dma_semaphore, #tpu.memory_space<semaphore_mem>>
    tpu.enqueue_dma source(%132 : memref<1x32xf32, #tpu.memory_space<any>>) target(%133 : memref<1x32xf32, #tpu.memory_space<vmem>>) target_semaphore(%135 : memref<!tpu.dma_semaphore, #tpu.memory_space<semaphore_mem>>)
    %c15_i32 = arith.constant 15 : i32
    %136 = arith.addi %0, %c15_i32 : i32
    %137 = arith.index_cast %136 : i32 to index
    %138 = memref.load %arg1[%137] : memref<16xi32, #tpu.memory_space<smem>>
    %c0_i32_89 = arith.constant 0 : i32
    %139 = arith.maxsi %138, %c0_i32_89 : i32
    %c63_i32_90 = arith.constant 63 : i32
    %140 = arith.minsi %139, %c63_i32_90 : i32
    %c15_i32_91 = arith.constant 15 : i32
    %c0_i32_92 = arith.constant 0 : i32
    %141 = tpu.memref_slice %arg2[%140, %c0_i32_92] : memref<64x32xf32, #tpu.memory_space<any>> -> memref<1x32xf32, #tpu.memory_space<any>>
    %c15_i32_93 = arith.constant 15 : i32
    %c0_i32_94 = arith.constant 0 : i32
    %142 = tpu.memref_slice %arg3[%c15_i32_93, %c0_i32_94] : memref<16x32xf32, #tpu.memory_space<vmem>> -> memref<1x32xf32, #tpu.memory_space<vmem>>
    %143 = tpu.memref_slice %arg4[%c15_i32_91] : memref<16x!tpu.dma_semaphore, #tpu.memory_space<semaphore_mem>> -> memref<1x!tpu.dma_semaphore, #tpu.memory_space<semaphore_mem>>
    %144 = tpu.memref_squeeze %143 : memref<1x!tpu.dma_semaphore, #tpu.memory_space<semaphore_mem>> -> memref<!tpu.dma_semaphore, #tpu.memory_space<semaphore_mem>>
    tpu.enqueue_dma source(%141 : memref<1x32xf32, #tpu.memory_space<any>>) target(%142 : memref<1x32xf32, #tpu.memory_space<vmem>>) target_semaphore(%144 : memref<!tpu.dma_semaphore, #tpu.memory_space<semaphore_mem>>)
    %c0_i32_95 = arith.constant 0 : i32
    %c0_i32_96 = arith.constant 0 : i32
    %c0_i32_97 = arith.constant 0 : i32
    %145 = tpu.memref_slice %arg2[%c0_i32_96, %c0_i32_97] : memref<64x32xf32, #tpu.memory_space<any>> -> memref<1x32xf32, #tpu.memory_space<any>>
    %c0_i32_98 = arith.constant 0 : i32
    %c0_i32_99 = arith.constant 0 : i32
    %146 = tpu.memref_slice %arg3[%c0_i32_98, %c0_i32_99] : memref<16x32xf32, #tpu.memory_space<vmem>> -> memref<1x32xf32, #tpu.memory_space<vmem>>
    %147 = tpu.memref_slice %arg4[%c0_i32_95] : memref<16x!tpu.dma_semaphore, #tpu.memory_space<semaphore_mem>> -> memref<1x!tpu.dma_semaphore, #tpu.memory_space<semaphore_mem>>
    %148 = tpu.memref_squeeze %147 : memref<1x!tpu.dma_semaphore, #tpu.memory_space<semaphore_mem>> -> memref<!tpu.dma_semaphore, #tpu.memory_space<semaphore_mem>>
    tpu.wait_dma2 semaphore(%148 : memref<!tpu.dma_semaphore, #tpu.memory_space<semaphore_mem>>) src(%145 : memref<1x32xf32, #tpu.memory_space<any>>) dst(%146 : memref<1x32xf32, #tpu.memory_space<vmem>>)
    %c1_i32_100 = arith.constant 1 : i32
    %c0_i32_101 = arith.constant 0 : i32
    %c0_i32_102 = arith.constant 0 : i32
    %149 = tpu.memref_slice %arg2[%c0_i32_101, %c0_i32_102] : memref<64x32xf32, #tpu.memory_space<any>> -> memref<1x32xf32, #tpu.memory_space<any>>
    %c1_i32_103 = arith.constant 1 : i32
    %c0_i32_104 = arith.constant 0 : i32
    %150 = tpu.memref_slice %arg3[%c1_i32_103, %c0_i32_104] : memref<16x32xf32, #tpu.memory_space<vmem>> -> memref<1x32xf32, #tpu.memory_space<vmem>>
    %151 = tpu.memref_slice %arg4[%c1_i32_100] : memref<16x!tpu.dma_semaphore, #tpu.memory_space<semaphore_mem>> -> memref<1x!tpu.dma_semaphore, #tpu.memory_space<semaphore_mem>>
    %152 = tpu.memref_squeeze %151 : memref<1x!tpu.dma_semaphore, #tpu.memory_space<semaphore_mem>> -> memref<!tpu.dma_semaphore, #tpu.memory_space<semaphore_mem>>
    tpu.wait_dma2 semaphore(%152 : memref<!tpu.dma_semaphore, #tpu.memory_space<semaphore_mem>>) src(%149 : memref<1x32xf32, #tpu.memory_space<any>>) dst(%150 : memref<1x32xf32, #tpu.memory_space<vmem>>)
    %c2_i32_105 = arith.constant 2 : i32
    %c0_i32_106 = arith.constant 0 : i32
    %c0_i32_107 = arith.constant 0 : i32
    %153 = tpu.memref_slice %arg2[%c0_i32_106, %c0_i32_107] : memref<64x32xf32, #tpu.memory_space<any>> -> memref<1x32xf32, #tpu.memory_space<any>>
    %c2_i32_108 = arith.constant 2 : i32
    %c0_i32_109 = arith.constant 0 : i32
    %154 = tpu.memref_slice %arg3[%c2_i32_108, %c0_i32_109] : memref<16x32xf32, #tpu.memory_space<vmem>> -> memref<1x32xf32, #tpu.memory_space<vmem>>
    %155 = tpu.memref_slice %arg4[%c2_i32_105] : memref<16x!tpu.dma_semaphore, #tpu.memory_space<semaphore_mem>> -> memref<1x!tpu.dma_semaphore, #tpu.memory_space<semaphore_mem>>
    %156 = tpu.memref_squeeze %155 : memref<1x!tpu.dma_semaphore, #tpu.memory_space<semaphore_mem>> -> memref<!tpu.dma_semaphore, #tpu.memory_space<semaphore_mem>>
    tpu.wait_dma2 semaphore(%156 : memref<!tpu.dma_semaphore, #tpu.memory_space<semaphore_mem>>) src(%153 : memref<1x32xf32, #tpu.memory_space<any>>) dst(%154 : memref<1x32xf32, #tpu.memory_space<vmem>>)
    %c3_i32_110 = arith.constant 3 : i32
    %c0_i32_111 = arith.constant 0 : i32
    %c0_i32_112 = arith.constant 0 : i32
    %157 = tpu.memref_slice %arg2[%c0_i32_111, %c0_i32_112] : memref<64x32xf32, #tpu.memory_space<any>> -> memref<1x32xf32, #tpu.memory_space<any>>
    %c3_i32_113 = arith.constant 3 : i32
    %c0_i32_114 = arith.constant 0 : i32
    %158 = tpu.memref_slice %arg3[%c3_i32_113, %c0_i32_114] : memref<16x32xf32, #tpu.memory_space<vmem>> -> memref<1x32xf32, #tpu.memory_space<vmem>>
    %159 = tpu.memref_slice %arg4[%c3_i32_110] : memref<16x!tpu.dma_semaphore, #tpu.memory_space<semaphore_mem>> -> memref<1x!tpu.dma_semaphore, #tpu.memory_space<semaphore_mem>>
    %160 = tpu.memref_squeeze %159 : memref<1x!tpu.dma_semaphore, #tpu.memory_space<semaphore_mem>> -> memref<!tpu.dma_semaphore, #tpu.memory_space<semaphore_mem>>
    tpu.wait_dma2 semaphore(%160 : memref<!tpu.dma_semaphore, #tpu.memory_space<semaphore_mem>>) src(%157 : memref<1x32xf32, #tpu.memory_space<any>>) dst(%158 : memref<1x32xf32, #tpu.memory_space<vmem>>)
    %c4_i32_115 = arith.constant 4 : i32
    %c0_i32_116 = arith.constant 0 : i32
    %c0_i32_117 = arith.constant 0 : i32
    %161 = tpu.memref_slice %arg2[%c0_i32_116, %c0_i32_117] : memref<64x32xf32, #tpu.memory_space<any>> -> memref<1x32xf32, #tpu.memory_space<any>>
    %c4_i32_118 = arith.constant 4 : i32
    %c0_i32_119 = arith.constant 0 : i32
    %162 = tpu.memref_slice %arg3[%c4_i32_118, %c0_i32_119] : memref<16x32xf32, #tpu.memory_space<vmem>> -> memref<1x32xf32, #tpu.memory_space<vmem>>
    %163 = tpu.memref_slice %arg4[%c4_i32_115] : memref<16x!tpu.dma_semaphore, #tpu.memory_space<semaphore_mem>> -> memref<1x!tpu.dma_semaphore, #tpu.memory_space<semaphore_mem>>
    %164 = tpu.memref_squeeze %163 : memref<1x!tpu.dma_semaphore, #tpu.memory_space<semaphore_mem>> -> memref<!tpu.dma_semaphore, #tpu.memory_space<semaphore_mem>>
    tpu.wait_dma2 semaphore(%164 : memref<!tpu.dma_semaphore, #tpu.memory_space<semaphore_mem>>) src(%161 : memref<1x32xf32, #tpu.memory_space<any>>) dst(%162 : memref<1x32xf32, #tpu.memory_space<vmem>>)
    %c5_i32_120 = arith.constant 5 : i32
    %c0_i32_121 = arith.constant 0 : i32
    %c0_i32_122 = arith.constant 0 : i32
    %165 = tpu.memref_slice %arg2[%c0_i32_121, %c0_i32_122] : memref<64x32xf32, #tpu.memory_space<any>> -> memref<1x32xf32, #tpu.memory_space<any>>
    %c5_i32_123 = arith.constant 5 : i32
    %c0_i32_124 = arith.constant 0 : i32
    %166 = tpu.memref_slice %arg3[%c5_i32_123, %c0_i32_124] : memref<16x32xf32, #tpu.memory_space<vmem>> -> memref<1x32xf32, #tpu.memory_space<vmem>>
    %167 = tpu.memref_slice %arg4[%c5_i32_120] : memref<16x!tpu.dma_semaphore, #tpu.memory_space<semaphore_mem>> -> memref<1x!tpu.dma_semaphore, #tpu.memory_space<semaphore_mem>>
    %168 = tpu.memref_squeeze %167 : memref<1x!tpu.dma_semaphore, #tpu.memory_space<semaphore_mem>> -> memref<!tpu.dma_semaphore, #tpu.memory_space<semaphore_mem>>
    tpu.wait_dma2 semaphore(%168 : memref<!tpu.dma_semaphore, #tpu.memory_space<semaphore_mem>>) src(%165 : memref<1x32xf32, #tpu.memory_space<any>>) dst(%166 : memref<1x32xf32, #tpu.memory_space<vmem>>)
    %c6_i32_125 = arith.constant 6 : i32
    %c0_i32_126 = arith.constant 0 : i32
    %c0_i32_127 = arith.constant 0 : i32
    %169 = tpu.memref_slice %arg2[%c0_i32_126, %c0_i32_127] : memref<64x32xf32, #tpu.memory_space<any>> -> memref<1x32xf32, #tpu.memory_space<any>>
    %c6_i32_128 = arith.constant 6 : i32
    %c0_i32_129 = arith.constant 0 : i32
    %170 = tpu.memref_slice %arg3[%c6_i32_128, %c0_i32_129] : memref<16x32xf32, #tpu.memory_space<vmem>> -> memref<1x32xf32, #tpu.memory_space<vmem>>
    %171 = tpu.memref_slice %arg4[%c6_i32_125] : memref<16x!tpu.dma_semaphore, #tpu.memory_space<semaphore_mem>> -> memref<1x!tpu.dma_semaphore, #tpu.memory_space<semaphore_mem>>
    %172 = tpu.memref_squeeze %171 : memref<1x!tpu.dma_semaphore, #tpu.memory_space<semaphore_mem>> -> memref<!tpu.dma_semaphore, #tpu.memory_space<semaphore_mem>>
    tpu.wait_dma2 semaphore(%172 : memref<!tpu.dma_semaphore, #tpu.memory_space<semaphore_mem>>) src(%169 : memref<1x32xf32, #tpu.memory_space<any>>) dst(%170 : memref<1x32xf32, #tpu.memory_space<vmem>>)
    %c7_i32_130 = arith.constant 7 : i32
    %c0_i32_131 = arith.constant 0 : i32
    %c0_i32_132 = arith.constant 0 : i32
    %173 = tpu.memref_slice %arg2[%c0_i32_131, %c0_i32_132] : memref<64x32xf32, #tpu.memory_space<any>> -> memref<1x32xf32, #tpu.memory_space<any>>
    %c7_i32_133 = arith.constant 7 : i32
    %c0_i32_134 = arith.constant 0 : i32
    %174 = tpu.memref_slice %arg3[%c7_i32_133, %c0_i32_134] : memref<16x32xf32, #tpu.memory_space<vmem>> -> memref<1x32xf32, #tpu.memory_space<vmem>>
    %175 = tpu.memref_slice %arg4[%c7_i32_130] : memref<16x!tpu.dma_semaphore, #tpu.memory_space<semaphore_mem>> -> memref<1x!tpu.dma_semaphore, #tpu.memory_space<semaphore_mem>>
    %176 = tpu.memref_squeeze %175 : memref<1x!tpu.dma_semaphore, #tpu.memory_space<semaphore_mem>> -> memref<!tpu.dma_semaphore, #tpu.memory_space<semaphore_mem>>
    tpu.wait_dma2 semaphore(%176 : memref<!tpu.dma_semaphore, #tpu.memory_space<semaphore_mem>>) src(%173 : memref<1x32xf32, #tpu.memory_space<any>>) dst(%174 : memref<1x32xf32, #tpu.memory_space<vmem>>)
    %c8_i32_135 = arith.constant 8 : i32
    %c0_i32_136 = arith.constant 0 : i32
    %c0_i32_137 = arith.constant 0 : i32
    %177 = tpu.memref_slice %arg2[%c0_i32_136, %c0_i32_137] : memref<64x32xf32, #tpu.memory_space<any>> -> memref<1x32xf32, #tpu.memory_space<any>>
    %c8_i32_138 = arith.constant 8 : i32
    %c0_i32_139 = arith.constant 0 : i32
    %178 = tpu.memref_slice %arg3[%c8_i32_138, %c0_i32_139] : memref<16x32xf32, #tpu.memory_space<vmem>> -> memref<1x32xf32, #tpu.memory_space<vmem>>
    %179 = tpu.memref_slice %arg4[%c8_i32_135] : memref<16x!tpu.dma_semaphore, #tpu.memory_space<semaphore_mem>> -> memref<1x!tpu.dma_semaphore, #tpu.memory_space<semaphore_mem>>
    %180 = tpu.memref_squeeze %179 : memref<1x!tpu.dma_semaphore, #tpu.memory_space<semaphore_mem>> -> memref<!tpu.dma_semaphore, #tpu.memory_space<semaphore_mem>>
    tpu.wait_dma2 semaphore(%180 : memref<!tpu.dma_semaphore, #tpu.memory_space<semaphore_mem>>) src(%177 : memref<1x32xf32, #tpu.memory_space<any>>) dst(%178 : memref<1x32xf32, #tpu.memory_space<vmem>>)
    %c9_i32_140 = arith.constant 9 : i32
    %c0_i32_141 = arith.constant 0 : i32
    %c0_i32_142 = arith.constant 0 : i32
    %181 = tpu.memref_slice %arg2[%c0_i32_141, %c0_i32_142] : memref<64x32xf32, #tpu.memory_space<any>> -> memref<1x32xf32, #tpu.memory_space<any>>
    %c9_i32_143 = arith.constant 9 : i32
    %c0_i32_144 = arith.constant 0 : i32
    %182 = tpu.memref_slice %arg3[%c9_i32_143, %c0_i32_144] : memref<16x32xf32, #tpu.memory_space<vmem>> -> memref<1x32xf32, #tpu.memory_space<vmem>>
    %183 = tpu.memref_slice %arg4[%c9_i32_140] : memref<16x!tpu.dma_semaphore, #tpu.memory_space<semaphore_mem>> -> memref<1x!tpu.dma_semaphore, #tpu.memory_space<semaphore_mem>>
    %184 = tpu.memref_squeeze %183 : memref<1x!tpu.dma_semaphore, #tpu.memory_space<semaphore_mem>> -> memref<!tpu.dma_semaphore, #tpu.memory_space<semaphore_mem>>
    tpu.wait_dma2 semaphore(%184 : memref<!tpu.dma_semaphore, #tpu.memory_space<semaphore_mem>>) src(%181 : memref<1x32xf32, #tpu.memory_space<any>>) dst(%182 : memref<1x32xf32, #tpu.memory_space<vmem>>)
    %c10_i32_145 = arith.constant 10 : i32
    %c0_i32_146 = arith.constant 0 : i32
    %c0_i32_147 = arith.constant 0 : i32
    %185 = tpu.memref_slice %arg2[%c0_i32_146, %c0_i32_147] : memref<64x32xf32, #tpu.memory_space<any>> -> memref<1x32xf32, #tpu.memory_space<any>>
    %c10_i32_148 = arith.constant 10 : i32
    %c0_i32_149 = arith.constant 0 : i32
    %186 = tpu.memref_slice %arg3[%c10_i32_148, %c0_i32_149] : memref<16x32xf32, #tpu.memory_space<vmem>> -> memref<1x32xf32, #tpu.memory_space<vmem>>
    %187 = tpu.memref_slice %arg4[%c10_i32_145] : memref<16x!tpu.dma_semaphore, #tpu.memory_space<semaphore_mem>> -> memref<1x!tpu.dma_semaphore, #tpu.memory_space<semaphore_mem>>
    %188 = tpu.memref_squeeze %187 : memref<1x!tpu.dma_semaphore, #tpu.memory_space<semaphore_mem>> -> memref<!tpu.dma_semaphore, #tpu.memory_space<semaphore_mem>>
    tpu.wait_dma2 semaphore(%188 : memref<!tpu.dma_semaphore, #tpu.memory_space<semaphore_mem>>) src(%185 : memref<1x32xf32, #tpu.memory_space<any>>) dst(%186 : memref<1x32xf32, #tpu.memory_space<vmem>>)
    %c11_i32_150 = arith.constant 11 : i32
    %c0_i32_151 = arith.constant 0 : i32
    %c0_i32_152 = arith.constant 0 : i32
    %189 = tpu.memref_slice %arg2[%c0_i32_151, %c0_i32_152] : memref<64x32xf32, #tpu.memory_space<any>> -> memref<1x32xf32, #tpu.memory_space<any>>
    %c11_i32_153 = arith.constant 11 : i32
    %c0_i32_154 = arith.constant 0 : i32
    %190 = tpu.memref_slice %arg3[%c11_i32_153, %c0_i32_154] : memref<16x32xf32, #tpu.memory_space<vmem>> -> memref<1x32xf32, #tpu.memory_space<vmem>>
    %191 = tpu.memref_slice %arg4[%c11_i32_150] : memref<16x!tpu.dma_semaphore, #tpu.memory_space<semaphore_mem>> -> memref<1x!tpu.dma_semaphore, #tpu.memory_space<semaphore_mem>>
    %192 = tpu.memref_squeeze %191 : memref<1x!tpu.dma_semaphore, #tpu.memory_space<semaphore_mem>> -> memref<!tpu.dma_semaphore, #tpu.memory_space<semaphore_mem>>
    tpu.wait_dma2 semaphore(%192 : memref<!tpu.dma_semaphore, #tpu.memory_space<semaphore_mem>>) src(%189 : memref<1x32xf32, #tpu.memory_space<any>>) dst(%190 : memref<1x32xf32, #tpu.memory_space<vmem>>)
    %c12_i32_155 = arith.constant 12 : i32
    %c0_i32_156 = arith.constant 0 : i32
    %c0_i32_157 = arith.constant 0 : i32
    %193 = tpu.memref_slice %arg2[%c0_i32_156, %c0_i32_157] : memref<64x32xf32, #tpu.memory_space<any>> -> memref<1x32xf32, #tpu.memory_space<any>>
    %c12_i32_158 = arith.constant 12 : i32
    %c0_i32_159 = arith.constant 0 : i32
    %194 = tpu.memref_slice %arg3[%c12_i32_158, %c0_i32_159] : memref<16x32xf32, #tpu.memory_space<vmem>> -> memref<1x32xf32, #tpu.memory_space<vmem>>
    %195 = tpu.memref_slice %arg4[%c12_i32_155] : memref<16x!tpu.dma_semaphore, #tpu.memory_space<semaphore_mem>> -> memref<1x!tpu.dma_semaphore, #tpu.memory_space<semaphore_mem>>
    %196 = tpu.memref_squeeze %195 : memref<1x!tpu.dma_semaphore, #tpu.memory_space<semaphore_mem>> -> memref<!tpu.dma_semaphore, #tpu.memory_space<semaphore_mem>>
    tpu.wait_dma2 semaphore(%196 : memref<!tpu.dma_semaphore, #tpu.memory_space<semaphore_mem>>) src(%193 : memref<1x32xf32, #tpu.memory_space<any>>) dst(%194 : memref<1x32xf32, #tpu.memory_space<vmem>>)
    %c13_i32_160 = arith.constant 13 : i32
    %c0_i32_161 = arith.constant 0 : i32
    %c0_i32_162 = arith.constant 0 : i32
    %197 = tpu.memref_slice %arg2[%c0_i32_161, %c0_i32_162] : memref<64x32xf32, #tpu.memory_space<any>> -> memref<1x32xf32, #tpu.memory_space<any>>
    %c13_i32_163 = arith.constant 13 : i32
    %c0_i32_164 = arith.constant 0 : i32
    %198 = tpu.memref_slice %arg3[%c13_i32_163, %c0_i32_164] : memref<16x32xf32, #tpu.memory_space<vmem>> -> memref<1x32xf32, #tpu.memory_space<vmem>>
    %199 = tpu.memref_slice %arg4[%c13_i32_160] : memref<16x!tpu.dma_semaphore, #tpu.memory_space<semaphore_mem>> -> memref<1x!tpu.dma_semaphore, #tpu.memory_space<semaphore_mem>>
    %200 = tpu.memref_squeeze %199 : memref<1x!tpu.dma_semaphore, #tpu.memory_space<semaphore_mem>> -> memref<!tpu.dma_semaphore, #tpu.memory_space<semaphore_mem>>
    tpu.wait_dma2 semaphore(%200 : memref<!tpu.dma_semaphore, #tpu.memory_space<semaphore_mem>>) src(%197 : memref<1x32xf32, #tpu.memory_space<any>>) dst(%198 : memref<1x32xf32, #tpu.memory_space<vmem>>)
    %c14_i32_165 = arith.constant 14 : i32
    %c0_i32_166 = arith.constant 0 : i32
    %c0_i32_167 = arith.constant 0 : i32
    %201 = tpu.memref_slice %arg2[%c0_i32_166, %c0_i32_167] : memref<64x32xf32, #tpu.memory_space<any>> -> memref<1x32xf32, #tpu.memory_space<any>>
    %c14_i32_168 = arith.constant 14 : i32
    %c0_i32_169 = arith.constant 0 : i32
    %202 = tpu.memref_slice %arg3[%c14_i32_168, %c0_i32_169] : memref<16x32xf32, #tpu.memory_space<vmem>> -> memref<1x32xf32, #tpu.memory_space<vmem>>
    %203 = tpu.memref_slice %arg4[%c14_i32_165] : memref<16x!tpu.dma_semaphore, #tpu.memory_space<semaphore_mem>> -> memref<1x!tpu.dma_semaphore, #tpu.memory_space<semaphore_mem>>
    %204 = tpu.memref_squeeze %203 : memref<1x!tpu.dma_semaphore, #tpu.memory_space<semaphore_mem>> -> memref<!tpu.dma_semaphore, #tpu.memory_space<semaphore_mem>>
    tpu.wait_dma2 semaphore(%204 : memref<!tpu.dma_semaphore, #tpu.memory_space<semaphore_mem>>) src(%201 : memref<1x32xf32, #tpu.memory_space<any>>) dst(%202 : memref<1x32xf32, #tpu.memory_space<vmem>>)
    %c15_i32_170 = arith.constant 15 : i32
    %c0_i32_171 = arith.constant 0 : i32
    %c0_i32_172 = arith.constant 0 : i32
    %205 = tpu.memref_slice %arg2[%c0_i32_171, %c0_i32_172] : memref<64x32xf32, #tpu.memory_space<any>> -> memref<1x32xf32, #tpu.memory_space<any>>
    %c15_i32_173 = arith.constant 15 : i32
    %c0_i32_174 = arith.constant 0 : i32
    %206 = tpu.memref_slice %arg3[%c15_i32_173, %c0_i32_174] : memref<16x32xf32, #tpu.memory_space<vmem>> -> memref<1x32xf32, #tpu.memory_space<vmem>>
    %207 = tpu.memref_slice %arg4[%c15_i32_170] : memref<16x!tpu.dma_semaphore, #tpu.memory_space<semaphore_mem>> -> memref<1x!tpu.dma_semaphore, #tpu.memory_space<semaphore_mem>>
    %208 = tpu.memref_squeeze %207 : memref<1x!tpu.dma_semaphore, #tpu.memory_space<semaphore_mem>> -> memref<!tpu.dma_semaphore, #tpu.memory_space<semaphore_mem>>
    tpu.wait_dma2 semaphore(%208 : memref<!tpu.dma_semaphore, #tpu.memory_space<semaphore_mem>>) src(%205 : memref<1x32xf32, #tpu.memory_space<any>>) dst(%206 : memref<1x32xf32, #tpu.memory_space<vmem>>)
    return
  }
  func.func @transform_1(%arg0: i32, %arg1: memref<16xi32, #tpu.memory_space<smem>>) -> (i32, i32) {
    %c0_i32 = arith.constant 0 : i32
    %c0_i32_0 = arith.constant 0 : i32
    return %arg0, %c0_i32 : i32, i32
  }
}

</mosaic_0001>

<llo_original>
// kernel: embed_lookup.1
$region0: #{embed_lookup.1}
  #allocation0 [shape = 'u32[]', space=smem, size = 0x4, offset = 0x4, fixed_abs, tag = 'smem constant byte address 0x4 - core index']
  #allocation1 [shape = 'u32[72,128]{1,0:T(1,128)}', space=vmem, size = 0x9000, scoped, tag = 'internal scratch']
  #allocation2 [shape = 's32[16]{0}', space=sflag, size = 0x40, scoped, tag = 'scratch operand']
  #allocation3 [shape = 's32[1]{0}', space=sflag, size = 0x4, scoped, tag = 'scoped memory for embed_lookup.1']
  #allocation4 [shape = 'u8[512]{0}', space=smem, size = 0x200, scoped, tag = 'prefetched SMEM operand 0']
  #allocation7 [shape = 's32[]', space=sflag, size = 0x4, offset = 0, fixed_abs, tag = 'sflag constant byte address 0x0 - dummy sync flag']
  #allocation8 [shape = 's32[]', space=sflag, size = 0x4, offset = 0, fixed_abs, tag = 'sflag constant byte address 0x0 - dummy sync flag']
  #allocation9 [shape = 's32[]', space=sflag, size = 0x4, offset = 0, fixed_abs, tag = 'sflag constant byte address 0x0 - dummy sync flag']
  #allocation10 [shape = 's32[]', space=sflag, size = 0x4, offset = 0, fixed_abs, tag = 'sflag constant byte address 0x0 - dummy sync flag']
  #allocation11 [shape = 's32[]', space=sflag, size = 0x4, offset = 0, fixed_abs, tag = 'sflag constant byte address 0x0 - dummy sync flag']
  #allocation12 [shape = 's32[]', space=sflag, size = 0x4, offset = 0, fixed_abs, tag = 'sflag constant byte address 0x0 - dummy sync flag']
  #allocation13 [shape = 's32[]', space=sflag, size = 0x4, offset = 0, fixed_abs, tag = 'sflag constant byte address 0x0 - dummy sync flag']
  #allocation14 [shape = 's32[]', space=sflag, size = 0x4, offset = 0, fixed_abs, tag = 'sflag constant byte address 0x0 - dummy sync flag']
  #allocation15 [shape = 's32[]', space=sflag, size = 0x4, offset = 0, fixed_abs, tag = 'sflag constant byte address 0x0 - dummy sync flag']
  #allocation16 [shape = 's32[]', space=sflag, size = 0x4, offset = 0, fixed_abs, tag = 'sflag constant byte address 0x0 - dummy sync flag']
  #allocation17 [shape = 's32[]', space=sflag, size = 0x4, offset = 0, fixed_abs, tag = 'sflag constant byte address 0x0 - dummy sync flag']
  #allocation18 [shape = 's32[]', space=sflag, size = 0x4, offset = 0, fixed_abs, tag = 'sflag constant byte address 0x0 - dummy sync flag']
  #allocation19 [shape = 's32[]', space=sflag, size = 0x4, offset = 0, fixed_abs, tag = 'sflag constant byte address 0x0 - dummy sync flag']
  #allocation20 [shape = 's32[]', space=sflag, size = 0x4, offset = 0, fixed_abs, tag = 'sflag constant byte address 0x0 - dummy sync flag']
  #allocation21 [shape = 's32[]', space=sflag, size = 0x4, offset = 0, fixed_abs, tag = 'sflag constant byte address 0x0 - dummy sync flag']
  #allocation22 [shape = 's32[]', space=sflag, size = 0x4, offset = 0, fixed_abs, tag = 'sflag constant byte address 0x0 - dummy sync flag']
  %s0 = inlined_call_operand.vmem [shape: s32[16], index: 0, kind: input, shape index: {}]
  %s1 = inlined_call_operand.vmem [shape: f32[64,32], index: 1, kind: input, shape index: {}]
  %s2 = inlined_call_operand.hbm [shape: f32[16,32], index: 2, kind: output, shape index: {}]
  %s3 = sld [smem:[#allocation0]]
  $region490: #{embed_lookup.1} parent=0
    _
  %s5 = ssub.s32 1, %s3
  %s6 = scalar_select 0, %s5, %s3
  %s8 = sshll.u32 %s0, 4
  %s9 = int_to_ptr.vmem [resolvable:$true] %s8
  %11 = dma.vmem_to_smem %s9, 16, [#allocation4], [#allocation3]
  %13 = dma.done [#allocation3], 16
  %14 = sfence
  $region1: #{embed_lookup.1} parent=0
    #allocation5 [shape = 'u8[8192]{0}', space=vmem, size = 0x2000, scoped, tag = 'output window, operand 0, single buffered']
    #allocation6 [shape = 's32[1]{0}', space=sflag, size = 0x4, scoped, tag = 'scoped memory for embed_lookup.1']
    %15 = vsyncpa [#allocation6], 0
    %s16 = smul.u32 0, 16
    %s17 = sld [smem:[#allocation4 + %s16]]
    %p18 = scmp.gt.s32.totalorder %s17, 0
    %s19 = scalar_select %p18, %s17, 0
    %p20 = scmp.lt.s32.totalorder %s19, 63
    %s21 = scalar_select %p20, %s19, 63
    %s22 = scalar_lea.vmem %s1, %s21
    // Predicated region
    $region2: #{embed_lookup.1} parent=1 // pred_check
      _
    $region3: #{embed_lookup.1} parent=1 // pred_check_branch
      %24 = sbr.rel target = $region5
    $region4: #{embed_lookup.1} parent=1 // pred_region
      // Predicated region
      $region17: #{embed_lookup.1} parent=4 // pred_check
        _
      $region18: #{embed_lookup.1} parent=4 // pred_check_branch
        %40 = sbr.rel (0) target = $region20
      $region19: #{embed_lookup.1} parent=4 // pred_region
        %s42 = ssub.s32 2, 1
        loop: start=0, step=1, limit=1
        $region21: #{embed_lookup.1} parent=19 // loop_pre_header
          _
        $region22: #{embed_lookup.1} parent=19 // loop_header
          %s44 = sphi 0, %s48
          %p45 = scmp.ge.s32.totalorder %s44, 1
          %s49 = sphi %s22, %s22
          %s50 = sphi [#allocation5], [#allocation5]
        $region23: #{embed_lookup.1} parent=19 // loop_header_branch
          %47 = sbr.rel (%p45) target = $region27
        $region24: #{embed_lookup.1} parent=19 // loop_body
          %v51 = vld [vmem:[%s49] sm:%s42]
          %52 = vst [vmem:[%s50] sm:%s42] %v51
        $region25: #{embed_lookup.1} parent=19 // loop_footer
          %s48 = sadd.s32 1, %s44
        $region26: #{embed_lookup.1} parent=19 // loop_footer_branch
          %43 = sbr.rel target = $region22
        $region27: #{embed_lookup.1} parent=19 // loop_exit
          _
      $region20: #{embed_lookup.1} parent=4 // pred_fallthru
        _
    $region5: #{embed_lookup.1} parent=1 // pred_fallthru
      _
    // Predicated region
    $region6: #{embed_lookup.1} parent=1 // pred_check
      _
    $region7: #{embed_lookup.1} parent=1 // pred_check_branch
      %26 = sbr.rel (0) target = $region9
    $region8: #{embed_lookup.1} parent=1 // pred_region
      %s28 = ssub.s32 2, 1
      loop: start=0, step=1, limit=1
      $region10: #{embed_lookup.1} parent=8 // loop_pre_header
        _
      $region11: #{embed_lookup.1} parent=8 // loop_header
        %s30 = sphi 0, %s34
        %p31 = scmp.ge.s32.totalorder %s30, 1
        %s35 = sphi %s22, %s22
        %s36 = sphi [#allocation5], [#allocation5]
      $region12: #{embed_lookup.1} parent=8 // loop_header_branch
        %33 = sbr.rel (%p31) target = $region16
      $region13: #{embed_lookup.1} parent=8 // loop_body
        %v37 = vld [vmem:[%s35] sm:%s28]
        %38 = vst [vmem:[%s36] sm:%s28] %v37
      $region14: #{embed_lookup.1} parent=8 // loop_footer
        %s34 = sadd.s32 1, %s30
      $region15: #{embed_lookup.1} parent=8 // loop_footer_branch
        %29 = sbr.rel target = $region11
      $region16: #{embed_lookup.1} parent=8 // loop_exit
        _
    $region9: #{embed_lookup.1} parent=1 // pred_fallthru
      _
    // Predicated region
    $region28: #{embed_lookup.1} parent=1 // pred_check
      _
    $region29: #{embed_lookup.1} parent=1 // pred_check_branch
      %55 = sbr.rel (0) target = $region31
    $region30: #{embed_lookup.1} parent=1 // pred_region
      %56 = vsyncadd [#allocation2], 16
    $region31: #{embed_lookup.1} parent=1 // pred_fallthru
      _
    %s57 = sadd.s32 %s16, 1
    %s58 = sld [smem:[#allocation4 + %s57]]
    %p59 = scmp.gt.s32.totalorder %s58, 0
    %s60 = scalar_select %p59, %s58, 0
    %p61 = scmp.lt.s32.totalorder %s60, 63
    %s62 = scalar_select %p61, %s60, 63
    %s63 = scalar_lea.vmem %s1, %s62
    %s64 = scalar_lea.vmem [#allocation5], 1
    %s65 = scalar_lea.sflag [#allocation2], 1
    // Predicated region
    $region32: #{embed_lookup.1} parent=1 // pred_check
      _
    $region33: #{embed_lookup.1} parent=1 // pred_check_branch
      %67 = sbr.rel target = $region35
    $region34: #{embed_lookup.1} parent=1 // pred_region
      // Predicated region
      $region47: #{embed_lookup.1} parent=34 // pred_check
        _
      $region48: #{embed_lookup.1} parent=34 // pred_check_branch
        %83 = sbr.rel (0) target = $region50
      $region49: #{embed_lookup.1} parent=34 // pred_region
        %s85 = ssub.s32 2, 1
        loop: start=0, step=1, limit=1
        $region51: #{embed_lookup.1} parent=49 // loop_pre_header
          _
        $region52: #{embed_lookup.1} parent=49 // loop_header
          %s87 = sphi 0, %s91
          %p88 = scmp.ge.s32.totalorder %s87, 1
          %s92 = sphi %s63, %s63
          %s93 = sphi %s64, %s64
        $region53: #{embed_lookup.1} parent=49 // loop_header_branch
          %90 = sbr.rel (%p88) target = $region57
        $region54: #{embed_lookup.1} parent=49 // loop_body
          %v94 = vld [vmem:[%s92] sm:%s85]
          %95 = vst [vmem:[%s93] sm:%s85] %v94
        $region55: #{embed_lookup.1} parent=49 // loop_footer
          %s91 = sadd.s32 1, %s87
        $region56: #{embed_lookup.1} parent=49 // loop_footer_branch
          %86 = sbr.rel target = $region52
        $region57: #{embed_lookup.1} parent=49 // loop_exit
          _
      $region50: #{embed_lookup.1} parent=34 // pred_fallthru
        _
    $region35: #{embed_lookup.1} parent=1 // pred_fallthru
      _
    // Predicated region
    $region36: #{embed_lookup.1} parent=1 // pred_check
      _
    $region37: #{embed_lookup.1} parent=1 // pred_check_branch
      %69 = sbr.rel (0) target = $region39
    $region38: #{embed_lookup.1} parent=1 // pred_region
      %s71 = ssub.s32 2, 1
      loop: start=0, step=1, limit=1
      $region40: #{embed_lookup.1} parent=38 // loop_pre_header
        _
      $region41: #{embed_lookup.1} parent=38 // loop_header
        %s73 = sphi 0, %s77
        %p74 = scmp.ge.s32.totalorder %s73, 1
        %s78 = sphi %s63, %s63
        %s79 = sphi %s64, %s64
      $region42: #{embed_lookup.1} parent=38 // loop_header_branch
        %76 = sbr.rel (%p74) target = $region46
      $region43: #{embed_lookup.1} parent=38 // loop_body
        %v80 = vld [vmem:[%s78] sm:%s71]
        %81 = vst [vmem:[%s79] sm:%s71] %v80
      $region44: #{embed_lookup.1} parent=38 // loop_footer
        %s77 = sadd.s32 1, %s73
      $region45: #{embed_lookup.1} parent=38 // loop_footer_branch
        %72 = sbr.rel target = $region41
      $region46: #{embed_lookup.1} parent=38 // loop_exit
        _
    $region39: #{embed_lookup.1} parent=1 // pred_fallthru
      _
    // Predicated region
    $region58: #{embed_lookup.1} parent=1 // pred_check
      _
    $region59: #{embed_lookup.1} parent=1 // pred_check_branch
      %98 = sbr.rel (0) target = $region61
    $region60: #{embed_lookup.1} parent=1 // pred_region
      %99 = vsyncadd %s65, 16
    $region61: #{embed_lookup.1} parent=1 // pred_fallthru
      _
    %s100 = sadd.s32 %s16, 2
    %s101 = sld [smem:[#allocation4 + %s100]]
    %p102 = scmp.gt.s32.totalorder %s101, 0
    %s103 = scalar_select %p102, %s101, 0
    %p104 = scmp.lt.s32.totalorder %s103, 63
    %s105 = scalar_select %p104, %s103, 63
    %s106 = scalar_lea.vmem %s1, %s105
    %s107 = scalar_lea.vmem [#allocation5], 2
    %s108 = scalar_lea.sflag [#allocation2], 2
    // Predicated region
    $region62: #{embed_lookup.1} parent=1 // pred_check
      _
    $region63: #{embed_lookup.1} parent=1 // pred_check_branch
      %110 = sbr.rel target = $region65
    $region64: #{embed_lookup.1} parent=1 // pred_region
      // Predicated region
      $region77: #{embed_lookup.1} parent=64 // pred_check
        _
      $region78: #{embed_lookup.1} parent=64 // pred_check_branch
        %126 = sbr.rel (0) target = $region80
      $region79: #{embed_lookup.1} parent=64 // pred_region
        %s128 = ssub.s32 2, 1
        loop: start=0, step=1, limit=1
        $region81: #{embed_lookup.1} parent=79 // loop_pre_header
          _
        $region82: #{embed_lookup.1} parent=79 // loop_header
          %s130 = sphi 0, %s134
          %p131 = scmp.ge.s32.totalorder %s130, 1
          %s135 = sphi %s106, %s106
          %s136 = sphi %s107, %s107
        $region83: #{embed_lookup.1} parent=79 // loop_header_branch
          %133 = sbr.rel (%p131) target = $region87
        $region84: #{embed_lookup.1} parent=79 // loop_body
          %v137 = vld [vmem:[%s135] sm:%s128]
          %138 = vst [vmem:[%s136] sm:%s128] %v137
        $region85: #{embed_lookup.1} parent=79 // loop_footer
          %s134 = sadd.s32 1, %s130
        $region86: #{embed_lookup.1} parent=79 // loop_footer_branch
          %129 = sbr.rel target = $region82
        $region87: #{embed_lookup.1} parent=79 // loop_exit
          _
      $region80: #{embed_lookup.1} parent=64 // pred_fallthru
        _
    $region65: #{embed_lookup.1} parent=1 // pred_fallthru
      _
    // Predicated region
    $region66: #{embed_lookup.1} parent=1 // pred_check
      _
    $region67: #{embed_lookup.1} parent=1 // pred_check_branch
      %112 = sbr.rel (0) target = $region69
    $region68: #{embed_lookup.1} parent=1 // pred_region
      %s114 = ssub.s32 2, 1
      loop: start=0, step=1, limit=1
      $region70: #{embed_lookup.1} parent=68 // loop_pre_header
        _
      $region71: #{embed_lookup.1} parent=68 // loop_header
        %s116 = sphi 0, %s120
        %p117 = scmp.ge.s32.totalorder %s116, 1
        %s121 = sphi %s106, %s106
        %s122 = sphi %s107, %s107
      $region72: #{embed_lookup.1} parent=68 // loop_header_branch
        %119 = sbr.rel (%p117) target = $region76
      $region73: #{embed_lookup.1} parent=68 // loop_body
        %v123 = vld [vmem:[%s121] sm:%s114]
        %124 = vst [vmem:[%s122] sm:%s114] %v123
      $region74: #{embed_lookup.1} parent=68 // loop_footer
        %s120 = sadd.s32 1, %s116
      $region75: #{embed_lookup.1} parent=68 // loop_footer_branch
        %115 = sbr.rel target = $region71
      $region76: #{embed_lookup.1} parent=68 // loop_exit
        _
    $region69: #{embed_lookup.1} parent=1 // pred_fallthru
      _
    // Predicated region
    $region88: #{embed_lookup.1} parent=1 // pred_check
      _
    $region89: #{embed_lookup.1} parent=1 // pred_check_branch
      %141 = sbr.rel (0) target = $region91
    $region90: #{embed_lookup.1} parent=1 // pred_region
      %142 = vsyncadd %s108, 16
    $region91: #{embed_lookup.1} parent=1 // pred_fallthru
      _
    %s143 = sadd.s32 %s16, 3
    %s144 = sld [smem:[#allocation4 + %s143]]
    %p145 = scmp.gt.s32.totalorder %s144, 0
    %s146 = scalar_select %p145, %s144, 0
    %p147 = scmp.lt.s32.totalorder %s146, 63
    %s148 = scalar_select %p147, %s146, 63
    %s149 = scalar_lea.vmem %s1, %s148
    %s150 = scalar_lea.vmem [#allocation5], 3
    %s151 = scalar_lea.sflag [#allocation2], 3
    // Predicated region
    $region92: #{embed_lookup.1} parent=1 // pred_check
      _
    $region93: #{embed_lookup.1} parent=1 // pred_check_branch
      %153 = sbr.rel target = $region95
    $region94: #{embed_lookup.1} parent=1 // pred_region
      // Predicated region
      $region107: #{embed_lookup.1} parent=94 // pred_check
        _
      $region108: #{embed_lookup.1} parent=94 // pred_check_branch
        %169 = sbr.rel (0) target = $region110
      $region109: #{embed_lookup.1} parent=94 // pred_region
        %s171 = ssub.s32 2, 1
        loop: start=0, step=1, limit=1
        $region111: #{embed_lookup.1} parent=109 // loop_pre_header
          _
        $region112: #{embed_lookup.1} parent=109 // loop_header
          %s173 = sphi 0, %s177
          %p174 = scmp.ge.s32.totalorder %s173, 1
          %s178 = sphi %s149, %s149
          %s179 = sphi %s150, %s150
        $region113: #{embed_lookup.1} parent=109 // loop_header_branch
          %176 = sbr.rel (%p174) target = $region117
        $region114: #{embed_lookup.1} parent=109 // loop_body
          %v180 = vld [vmem:[%s178] sm:%s171]
          %181 = vst [vmem:[%s179] sm:%s171] %v180
        $region115: #{embed_lookup.1} parent=109 // loop_footer
          %s177 = sadd.s32 1, %s173
        $region116: #{embed_lookup.1} parent=109 // loop_footer_branch
          %172 = sbr.rel target = $region112
        $region117: #{embed_lookup.1} parent=109 // loop_exit
          _
      $region110: #{embed_lookup.1} parent=94 // pred_fallthru
        _
    $region95: #{embed_lookup.1} parent=1 // pred_fallthru
      _
    // Predicated region
    $region96: #{embed_lookup.1} parent=1 // pred_check
      _
    $region97: #{embed_lookup.1} parent=1 // pred_check_branch
      %155 = sbr.rel (0) target = $region99
    $region98: #{embed_lookup.1} parent=1 // pred_region
      %s157 = ssub.s32 2, 1
      loop: start=0, step=1, limit=1
      $region100: #{embed_lookup.1} parent=98 // loop_pre_header
        _
      $region101: #{embed_lookup.1} parent=98 // loop_header
        %s159 = sphi 0, %s163
        %p160 = scmp.ge.s32.totalorder %s159, 1
        %s164 = sphi %s149, %s149
        %s165 = sphi %s150, %s150
      $region102: #{embed_lookup.1} parent=98 // loop_header_branch
        %162 = sbr.rel (%p160) target = $region106
      $region103: #{embed_lookup.1} parent=98 // loop_body
        %v166 = vld [vmem:[%s164] sm:%s157]
        %167 = vst [vmem:[%s165] sm:%s157] %v166
      $region104: #{embed_lookup.1} parent=98 // loop_footer
        %s163 = sadd.s32 1, %s159
      $region105: #{embed_lookup.1} parent=98 // loop_footer_branch
        %158 = sbr.rel target = $region101
      $region106: #{embed_lookup.1} parent=98 // loop_exit
        _
    $region99: #{embed_lookup.1} parent=1 // pred_fallthru
      _
    // Predicated region
    $region118: #{embed_lookup.1} parent=1 // pred_check
      _
    $region119: #{embed_lookup.1} parent=1 // pred_check_branch
      %184 = sbr.rel (0) target = $region121
    $region120: #{embed_lookup.1} parent=1 // pred_region
      %185 = vsyncadd %s151, 16
    $region121: #{embed_lookup.1} parent=1 // pred_fallthru
      _
    %s186 = sadd.s32 %s16, 4
    %s187 = sld [smem:[#allocation4 + %s186]]
    %p188 = scmp.gt.s32.totalorder %s187, 0
    %s189 = scalar_select %p188, %s187, 0
    %p190 = scmp.lt.s32.totalorder %s189, 63
    %s191 = scalar_select %p190, %s189, 63
    %s192 = scalar_lea.vmem %s1, %s191
    %s193 = scalar_lea.vmem [#allocation5], 4
    %s194 = scalar_lea.sflag [#allocation2], 4
    // Predicated region
    $region122: #{embed_lookup.1} parent=1 // pred_check
      _
    $region123: #{embed_lookup.1} parent=1 // pred_check_branch
      %196 = sbr.rel target = $region125
    $region124: #{embed_lookup.1} parent=1 // pred_region
      // Predicated region
      $region137: #{embed_lookup.1} parent=124 // pred_check
        _
      $region138: #{embed_lookup.1} parent=124 // pred_check_branch
        %212 = sbr.rel (0) target = $region140
      $region139: #{embed_lookup.1} parent=124 // pred_region
        %s214 = ssub.s32 2, 1
        loop: start=0, step=1, limit=1
        $region141: #{embed_lookup.1} parent=139 // loop_pre_header
          _
        $region142: #{embed_lookup.1} parent=139 // loop_header
          %s216 = sphi 0, %s220
          %p217 = scmp.ge.s32.totalorder %s216, 1
          %s221 = sphi %s192, %s192
          %s222 = sphi %s193, %s193
        $region143: #{embed_lookup.1} parent=139 // loop_header_branch
          %219 = sbr.rel (%p217) target = $region147
        $region144: #{embed_lookup.1} parent=139 // loop_body
          %v223 = vld [vmem:[%s221] sm:%s214]
          %224 = vst [vmem:[%s222] sm:%s214] %v223
        $region145: #{embed_lookup.1} parent=139 // loop_footer
          %s220 = sadd.s32 1, %s216
        $region146: #{embed_lookup.1} parent=139 // loop_footer_branch
          %215 = sbr.rel target = $region142
        $region147: #{embed_lookup.1} parent=139 // loop_exit
          _
      $region140: #{embed_lookup.1} parent=124 // pred_fallthru
        _
    $region125: #{embed_lookup.1} parent=1 // pred_fallthru
      _
    // Predicated region
    $region126: #{embed_lookup.1} parent=1 // pred_check
      _
    $region127: #{embed_lookup.1} parent=1 // pred_check_branch
      %198 = sbr.rel (0) target = $region129
    $region128: #{embed_lookup.1} parent=1 // pred_region
      %s200 = ssub.s32 2, 1
      loop: start=0, step=1, limit=1
      $region130: #{embed_lookup.1} parent=128 // loop_pre_header
        _
      $region131: #{embed_lookup.1} parent=128 // loop_header
        %s202 = sphi 0, %s206
        %p203 = scmp.ge.s32.totalorder %s202, 1
        %s207 = sphi %s192, %s192
        %s208 = sphi %s193, %s193
      $region132: #{embed_lookup.1} parent=128 // loop_header_branch
        %205 = sbr.rel (%p203) target = $region136
      $region133: #{embed_lookup.1} parent=128 // loop_body
        %v209 = vld [vmem:[%s207] sm:%s200]
        %210 = vst [vmem:[%s208] sm:%s200] %v209
      $region134: #{embed_lookup.1} parent=128 // loop_footer
        %s206 = sadd.s32 1, %s202
      $region135: #{embed_lookup.1} parent=128 // loop_footer_branch
        %201 = sbr.rel target = $region131
      $region136: #{embed_lookup.1} parent=128 // loop_exit
        _
    $region129: #{embed_lookup.1} parent=1 // pred_fallthru
      _
    // Predicated region
    $region148: #{embed_lookup.1} parent=1 // pred_check
      _
    $region149: #{embed_lookup.1} parent=1 // pred_check_branch
      %227 = sbr.rel (0) target = $region151
    $region150: #{embed_lookup.1} parent=1 // pred_region
      %228 = vsyncadd %s194, 16
    $region151: #{embed_lookup.1} parent=1 // pred_fallthru
      _
    %s229 = sadd.s32 %s16, 5
    %s230 = sld [smem:[#allocation4 + %s229]]
    %p231 = scmp.gt.s32.totalorder %s230, 0
    %s232 = scalar_select %p231, %s230, 0
    %p233 = scmp.lt.s32.totalorder %s232, 63
    %s234 = scalar_select %p233, %s232, 63
    %s235 = scalar_lea.vmem %s1, %s234
    %s236 = scalar_lea.vmem [#allocation5], 5
    %s237 = scalar_lea.sflag [#allocation2], 5
    // Predicated region
    $region152: #{embed_lookup.1} parent=1 // pred_check
      _
    $region153: #{embed_lookup.1} parent=1 // pred_check_branch
      %239 = sbr.rel target = $region155
    $region154: #{embed_lookup.1} parent=1 // pred_region
      // Predicated region
      $region167: #{embed_lookup.1} parent=154 // pred_check
        _
      $region168: #{embed_lookup.1} parent=154 // pred_check_branch
        %255 = sbr.rel (0) target = $region170
      $region169: #{embed_lookup.1} parent=154 // pred_region
        %s257 = ssub.s32 2, 1
        loop: start=0, step=1, limit=1
        $region171: #{embed_lookup.1} parent=169 // loop_pre_header
          _
        $region172: #{embed_lookup.1} parent=169 // loop_header
          %s259 = sphi 0, %s263
          %p260 = scmp.ge.s32.totalorder %s259, 1
          %s264 = sphi %s235, %s235
          %s265 = sphi %s236, %s236
        $region173: #{embed_lookup.1} parent=169 // loop_header_branch
          %262 = sbr.rel (%p260) target = $region177
        $region174: #{embed_lookup.1} parent=169 // loop_body
          %v266 = vld [vmem:[%s264] sm:%s257]
          %267 = vst [vmem:[%s265] sm:%s257] %v266
        $region175: #{embed_lookup.1} parent=169 // loop_footer
          %s263 = sadd.s32 1, %s259
        $region176: #{embed_lookup.1} parent=169 // loop_footer_branch
          %258 = sbr.rel target = $region172
        $region177: #{embed_lookup.1} parent=169 // loop_exit
          _
      $region170: #{embed_lookup.1} parent=154 // pred_fallthru
        _
    $region155: #{embed_lookup.1} parent=1 // pred_fallthru
      _
    // Predicated region
    $region156: #{embed_lookup.1} parent=1 // pred_check
      _
    $region157: #{embed_lookup.1} parent=1 // pred_check_branch
      %241 = sbr.rel (0) target = $region159
    $region158: #{embed_lookup.1} parent=1 // pred_region
      %s243 = ssub.s32 2, 1
      loop: start=0, step=1, limit=1
      $region160: #{embed_lookup.1} parent=158 // loop_pre_header
        _
      $region161: #{embed_lookup.1} parent=158 // loop_header
        %s245 = sphi 0, %s249
        %p246 = scmp.ge.s32.totalorder %s245, 1
        %s250 = sphi %s235, %s235
        %s251 = sphi %s236, %s236
      $region162: #{embed_lookup.1} parent=158 // loop_header_branch
        %248 = sbr.rel (%p246) target = $region166
      $region163: #{embed_lookup.1} parent=158 // loop_body
        %v252 = vld [vmem:[%s250] sm:%s243]
        %253 = vst [vmem:[%s251] sm:%s243] %v252
      $region164: #{embed_lookup.1} parent=158 // loop_footer
        %s249 = sadd.s32 1, %s245
      $region165: #{embed_lookup.1} parent=158 // loop_footer_branch
        %244 = sbr.rel target = $region161
      $region166: #{embed_lookup.1} parent=158 // loop_exit
        _
    $region159: #{embed_lookup.1} parent=1 // pred_fallthru
      _
    // Predicated region
    $region178: #{embed_lookup.1} parent=1 // pred_check
      _
    $region179: #{embed_lookup.1} parent=1 // pred_check_branch
      %270 = sbr.rel (0) target = $region181
    $region180: #{embed_lookup.1} parent=1 // pred_region
      %271 = vsyncadd %s237, 16
    $region181: #{embed_lookup.1} parent=1 // pred_fallthru
      _
    %s272 = sadd.s32 %s16, 6
    %s273 = sld [smem:[#allocation4 + %s272]]
    %p274 = scmp.gt.s32.totalorder %s273, 0
    %s275 = scalar_select %p274, %s273, 0
    %p276 = scmp.lt.s32.totalorder %s275, 63
    %s277 = scalar_select %p276, %s275, 63
    %s278 = scalar_lea.vmem %s1, %s277
    %s279 = scalar_lea.vmem [#allocation5], 6
    %s280 = scalar_lea.sflag [#allocation2], 6
    // Predicated region
    $region182: #{embed_lookup.1} parent=1 // pred_check
      _
    $region183: #{embed_lookup.1} parent=1 // pred_check_branch
      %282 = sbr.rel target = $region185
    $region184: #{embed_lookup.1} parent=1 // pred_region
      // Predicated region
      $region197: #{embed_lookup.1} parent=184 // pred_check
        _
      $region198: #{embed_lookup.1} parent=184 // pred_check_branch
        %298 = sbr.rel (0) target = $region200
      $region199: #{embed_lookup.1} parent=184 // pred_region
        %s300 = ssub.s32 2, 1
        loop: start=0, step=1, limit=1
        $region201: #{embed_lookup.1} parent=199 // loop_pre_header
          _
        $region202: #{embed_lookup.1} parent=199 // loop_header
          %s302 = sphi 0, %s306
          %p303 = scmp.ge.s32.totalorder %s302, 1
          %s307 = sphi %s278, %s278
          %s308 = sphi %s279, %s279
        $region203: #{embed_lookup.1} parent=199 // loop_header_branch
          %305 = sbr.rel (%p303) target = $region207
        $region204: #{embed_lookup.1} parent=199 // loop_body
          %v309 = vld [vmem:[%s307] sm:%s300]
          %310 = vst [vmem:[%s308] sm:%s300] %v309
        $region205: #{embed_lookup.1} parent=199 // loop_footer
          %s306 = sadd.s32 1, %s302
        $region206: #{embed_lookup.1} parent=199 // loop_footer_branch
          %301 = sbr.rel target = $region202
        $region207: #{embed_lookup.1} parent=199 // loop_exit
          _
      $region200: #{embed_lookup.1} parent=184 // pred_fallthru
        _
    $region185: #{embed_lookup.1} parent=1 // pred_fallthru
      _
    // Predicated region
    $region186: #{embed_lookup.1} parent=1 // pred_check
      _
    $region187: #{embed_lookup.1} parent=1 // pred_check_branch
      %284 = sbr.rel (0) target = $region189
    $region188: #{embed_lookup.1} parent=1 // pred_region
      %s286 = ssub.s32 2, 1
      loop: start=0, step=1, limit=1
      $region190: #{embed_lookup.1} parent=188 // loop_pre_header
        _
      $region191: #{embed_lookup.1} parent=188 // loop_header
        %s288 = sphi 0, %s292
        %p289 = scmp.ge.s32.totalorder %s288, 1
        %s293 = sphi %s278, %s278
        %s294 = sphi %s279, %s279
      $region192: #{embed_lookup.1} parent=188 // loop_header_branch
        %291 = sbr.rel (%p289) target = $region196
      $region193: #{embed_lookup.1} parent=188 // loop_body
        %v295 = vld [vmem:[%s293] sm:%s286]
        %296 = vst [vmem:[%s294] sm:%s286] %v295
      $region194: #{embed_lookup.1} parent=188 // loop_footer
        %s292 = sadd.s32 1, %s288
      $region195: #{embed_lookup.1} parent=188 // loop_footer_branch
        %287 = sbr.rel target = $region191
      $region196: #{embed_lookup.1} parent=188 // loop_exit
        _
    $region189: #{embed_lookup.1} parent=1 // pred_fallthru
      _
    // Predicated region
    $region208: #{embed_lookup.1} parent=1 // pred_check
      _
    $region209: #{embed_lookup.1} parent=1 // pred_check_branch
      %313 = sbr.rel (0) target = $region211
    $region210: #{embed_lookup.1} parent=1 // pred_region
      %314 = vsyncadd %s280, 16
    $region211: #{embed_lookup.1} parent=1 // pred_fallthru
      _
    %s315 = sadd.s32 %s16, 7
    %s316 = sld [smem:[#allocation4 + %s315]]
    %p317 = scmp.gt.s32.totalorder %s316, 0
    %s318 = scalar_select %p317, %s316, 0
    %p319 = scmp.lt.s32.totalorder %s318, 63
    %s320 = scalar_select %p319, %s318, 63
    %s321 = scalar_lea.vmem %s1, %s320
    %s322 = scalar_lea.vmem [#allocation5], 7
    %s323 = scalar_lea.sflag [#allocation2], 7
    // Predicated region
    $region212: #{embed_lookup.1} parent=1 // pred_check
      _
    $region213: #{embed_lookup.1} parent=1 // pred_check_branch
      %325 = sbr.rel target = $region215
    $region214: #{embed_lookup.1} parent=1 // pred_region
      // Predicated region
      $region227: #{embed_lookup.1} parent=214 // pred_check
        _
      $region228: #{embed_lookup.1} parent=214 // pred_check_branch
        %341 = sbr.rel (0) target = $region230
      $region229: #{embed_lookup.1} parent=214 // pred_region
        %s343 = ssub.s32 2, 1
        loop: start=0, step=1, limit=1
        $region231: #{embed_lookup.1} parent=229 // loop_pre_header
          _
        $region232: #{embed_lookup.1} parent=229 // loop_header
          %s345 = sphi 0, %s349
          %p346 = scmp.ge.s32.totalorder %s345, 1
          %s350 = sphi %s321, %s321
          %s351 = sphi %s322, %s322
        $region233: #{embed_lookup.1} parent=229 // loop_header_branch
          %348 = sbr.rel (%p346) target = $region237
        $region234: #{embed_lookup.1} parent=229 // loop_body
          %v352 = vld [vmem:[%s350] sm:%s343]
          %353 = vst [vmem:[%s351] sm:%s343] %v352
        $region235: #{embed_lookup.1} parent=229 // loop_footer
          %s349 = sadd.s32 1, %s345
        $region236: #{embed_lookup.1} parent=229 // loop_footer_branch
          %344 = sbr.rel target = $region232
        $region237: #{embed_lookup.1} parent=229 // loop_exit
          _
      $region230: #{embed_lookup.1} parent=214 // pred_fallthru
        _
    $region215: #{embed_lookup.1} parent=1 // pred_fallthru
      _
    // Predicated region
    $region216: #{embed_lookup.1} parent=1 // pred_check
      _
    $region217: #{embed_lookup.1} parent=1 // pred_check_branch
      %327 = sbr.rel (0) target = $region219
    $region218: #{embed_lookup.1} parent=1 // pred_region
      %s329 = ssub.s32 2, 1
      loop: start=0, step=1, limit=1
      $region220: #{embed_lookup.1} parent=218 // loop_pre_header
        _
      $region221: #{embed_lookup.1} parent=218 // loop_header
        %s331 = sphi 0, %s335
        %p332 = scmp.ge.s32.totalorder %s331, 1
        %s336 = sphi %s321, %s321
        %s337 = sphi %s322, %s322
      $region222: #{embed_lookup.1} parent=218 // loop_header_branch
        %334 = sbr.rel (%p332) target = $region226
      $region223: #{embed_lookup.1} parent=218 // loop_body
        %v338 = vld [vmem:[%s336] sm:%s329]
        %339 = vst [vmem:[%s337] sm:%s329] %v338
      $region224: #{embed_lookup.1} parent=218 // loop_footer
        %s335 = sadd.s32 1, %s331
      $region225: #{embed_lookup.1} parent=218 // loop_footer_branch
        %330 = sbr.rel target = $region221
      $region226: #{embed_lookup.1} parent=218 // loop_exit
        _
    $region219: #{embed_lookup.1} parent=1 // pred_fallthru
      _
    // Predicated region
    $region238: #{embed_lookup.1} parent=1 // pred_check
      _
    $region239: #{embed_lookup.1} parent=1 // pred_check_branch
      %356 = sbr.rel (0) target = $region241
    $region240: #{embed_lookup.1} parent=1 // pred_region
      %357 = vsyncadd %s323, 16
    $region241: #{embed_lookup.1} parent=1 // pred_fallthru
      _
    %s358 = sadd.s32 %s16, 8
    %s359 = sld [smem:[#allocation4 + %s358]]
    %p360 = scmp.gt.s32.totalorder %s359, 0
    %s361 = scalar_select %p360, %s359, 0
    %p362 = scmp.lt.s32.totalorder %s361, 63
    %s363 = scalar_select %p362, %s361, 63
    %s364 = scalar_lea.vmem %s1, %s363
    %s365 = scalar_lea.vmem [#allocation5], 8
    %s366 = scalar_lea.sflag [#allocation2], 8
    // Predicated region
    $region242: #{embed_lookup.1} parent=1 // pred_check
      _
    $region243: #{embed_lookup.1} parent=1 // pred_check_branch
      %368 = sbr.rel target = $region245
    $region244: #{embed_lookup.1} parent=1 // pred_region
      // Predicated region
      $region257: #{embed_lookup.1} parent=244 // pred_check
        _
      $region258: #{embed_lookup.1} parent=244 // pred_check_branch
        %384 = sbr.rel (0) target = $region260
      $region259: #{embed_lookup.1} parent=244 // pred_region
        %s386 = ssub.s32 2, 1
        loop: start=0, step=1, limit=1
        $region261: #{embed_lookup.1} parent=259 // loop_pre_header
          _
        $region262: #{embed_lookup.1} parent=259 // loop_header
          %s388 = sphi 0, %s392
          %p389 = scmp.ge.s32.totalorder %s388, 1
          %s393 = sphi %s364, %s364
          %s394 = sphi %s365, %s365
        $region263: #{embed_lookup.1} parent=259 // loop_header_branch
          %391 = sbr.rel (%p389) target = $region267
        $region264: #{embed_lookup.1} parent=259 // loop_body
          %v395 = vld [vmem:[%s393] sm:%s386]
          %396 = vst [vmem:[%s394] sm:%s386] %v395
        $region265: #{embed_lookup.1} parent=259 // loop_footer
          %s392 = sadd.s32 1, %s388
        $region266: #{embed_lookup.1} parent=259 // loop_footer_branch
          %387 = sbr.rel target = $region262
        $region267: #{embed_lookup.1} parent=259 // loop_exit
          _
      $region260: #{embed_lookup.1} parent=244 // pred_fallthru
        _
    $region245: #{embed_lookup.1} parent=1 // pred_fallthru
      _
    // Predicated region
    $region246: #{embed_lookup.1} parent=1 // pred_check
      _
    $region247: #{embed_lookup.1} parent=1 // pred_check_branch
      %370 = sbr.rel (0) target = $region249
    $region248: #{embed_lookup.1} parent=1 // pred_region
      %s372 = ssub.s32 2, 1
      loop: start=0, step=1, limit=1
      $region250: #{embed_lookup.1} parent=248 // loop_pre_header
        _
      $region251: #{embed_lookup.1} parent=248 // loop_header
        %s374 = sphi 0, %s378
        %p375 = scmp.ge.s32.totalorder %s374, 1
        %s379 = sphi %s364, %s364
        %s380 = sphi %s365, %s365
      $region252: #{embed_lookup.1} parent=248 // loop_header_branch
        %377 = sbr.rel (%p375) target = $region256
      $region253: #{embed_lookup.1} parent=248 // loop_body
        %v381 = vld [vmem:[%s379] sm:%s372]
        %382 = vst [vmem:[%s380] sm:%s372] %v381
      $region254: #{embed_lookup.1} parent=248 // loop_footer
        %s378 = sadd.s32 1, %s374
      $region255: #{embed_lookup.1} parent=248 // loop_footer_branch
        %373 = sbr.rel target = $region251
      $region256: #{embed_lookup.1} parent=248 // loop_exit
        _
    $region249: #{embed_lookup.1} parent=1 // pred_fallthru
      _
    // Predicated region
    $region268: #{embed_lookup.1} parent=1 // pred_check
      _
    $region269: #{embed_lookup.1} parent=1 // pred_check_branch
      %399 = sbr.rel (0) target = $region271
    $region270: #{embed_lookup.1} parent=1 // pred_region
      %400 = vsyncadd %s366, 16
    $region271: #{embed_lookup.1} parent=1 // pred_fallthru
      _
    %s401 = sadd.s32 %s16, 9
    %s402 = sld [smem:[#allocation4 + %s401]]
    %p403 = scmp.gt.s32.totalorder %s402, 0
    %s404 = scalar_select %p403, %s402, 0
    %p405 = scmp.lt.s32.totalorder %s404, 63
    %s406 = scalar_select %p405, %s404, 63
    %s407 = scalar_lea.vmem %s1, %s406
    %s408 = scalar_lea.vmem [#allocation5], 9
    %s409 = scalar_lea.sflag [#allocation2], 9
    // Predicated region
    $region272: #{embed_lookup.1} parent=1 // pred_check
      _
    $region273: #{embed_lookup.1} parent=1 // pred_check_branch
      %411 = sbr.rel target = $region275
    $region274: #{embed_lookup.1} parent=1 // pred_region
      // Predicated region
      $region287: #{embed_lookup.1} parent=274 // pred_check
        _
      $region288: #{embed_lookup.1} parent=274 // pred_check_branch
        %427 = sbr.rel (0) target = $region290
      $region289: #{embed_lookup.1} parent=274 // pred_region
        %s429 = ssub.s32 2, 1
        loop: start=0, step=1, limit=1
        $region291: #{embed_lookup.1} parent=289 // loop_pre_header
          _
        $region292: #{embed_lookup.1} parent=289 // loop_header
          %s431 = sphi 0, %s435
          %p432 = scmp.ge.s32.totalorder %s431, 1
          %s436 = sphi %s407, %s407
          %s437 = sphi %s408, %s408
        $region293: #{embed_lookup.1} parent=289 // loop_header_branch
          %434 = sbr.rel (%p432) target = $region297
        $region294: #{embed_lookup.1} parent=289 // loop_body
          %v438 = vld [vmem:[%s436] sm:%s429]
          %439 = vst [vmem:[%s437] sm:%s429] %v438
        $region295: #{embed_lookup.1} parent=289 // loop_footer
          %s435 = sadd.s32 1, %s431
        $region296: #{embed_lookup.1} parent=289 // loop_footer_branch
          %430 = sbr.rel target = $region292
        $region297: #{embed_lookup.1} parent=289 // loop_exit
          _
      $region290: #{embed_lookup.1} parent=274 // pred_fallthru
        _
    $region275: #{embed_lookup.1} parent=1 // pred_fallthru
      _
    // Predicated region
    $region276: #{embed_lookup.1} parent=1 // pred_check
      _
    $region277: #{embed_lookup.1} parent=1 // pred_check_branch
      %413 = sbr.rel (0) target = $region279
    $region278: #{embed_lookup.1} parent=1 // pred_region
      %s415 = ssub.s32 2, 1
      loop: start=0, step=1, limit=1
      $region280: #{embed_lookup.1} parent=278 // loop_pre_header
        _
      $region281: #{embed_lookup.1} parent=278 // loop_header
        %s417 = sphi 0, %s421
        %p418 = scmp.ge.s32.totalorder %s417, 1
        %s422 = sphi %s407, %s407
        %s423 = sphi %s408, %s408
      $region282: #{embed_lookup.1} parent=278 // loop_header_branch
        %420 = sbr.rel (%p418) target = $region286
      $region283: #{embed_lookup.1} parent=278 // loop_body
        %v424 = vld [vmem:[%s422] sm:%s415]
        %425 = vst [vmem:[%s423] sm:%s415] %v424
      $region284: #{embed_lookup.1} parent=278 // loop_footer
        %s421 = sadd.s32 1, %s417
      $region285: #{embed_lookup.1} parent=278 // loop_footer_branch
        %416 = sbr.rel target = $region281
      $region286: #{embed_lookup.1} parent=278 // loop_exit
        _
    $region279: #{embed_lookup.1} parent=1 // pred_fallthru
      _
    // Predicated region
    $region298: #{embed_lookup.1} parent=1 // pred_check
      _
    $region299: #{embed_lookup.1} parent=1 // pred_check_branch
      %442 = sbr.rel (0) target = $region301
    $region300: #{embed_lookup.1} parent=1 // pred_region
      %443 = vsyncadd %s409, 16
    $region301: #{embed_lookup.1} parent=1 // pred_fallthru
      _
    %s444 = sadd.s32 %s16, 10
    %s445 = sld [smem:[#allocation4 + %s444]]
    %p446 = scmp.gt.s32.totalorder %s445, 0
    %s447 = scalar_select %p446, %s445, 0
    %p448 = scmp.lt.s32.totalorder %s447, 63
    %s449 = scalar_select %p448, %s447, 63
    %s450 = scalar_lea.vmem %s1, %s449
    %s451 = scalar_lea.vmem [#allocation5], 10
    %s452 = scalar_lea.sflag [#allocation2], 10
    // Predicated region
    $region302: #{embed_lookup.1} parent=1 // pred_check
      _
    $region303: #{embed_lookup.1} parent=1 // pred_check_branch
      %454 = sbr.rel target = $region305
    $region304: #{embed_lookup.1} parent=1 // pred_region
      // Predicated region
      $region317: #{embed_lookup.1} parent=304 // pred_check
        _
      $region318: #{embed_lookup.1} parent=304 // pred_check_branch
        %470 = sbr.rel (0) target = $region320
      $region319: #{embed_lookup.1} parent=304 // pred_region
        %s472 = ssub.s32 2, 1
        loop: start=0, step=1, limit=1
        $region321: #{embed_lookup.1} parent=319 // loop_pre_header
          _
        $region322: #{embed_lookup.1} parent=319 // loop_header
          %s474 = sphi 0, %s478
          %p475 = scmp.ge.s32.totalorder %s474, 1
          %s479 = sphi %s450, %s450
          %s480 = sphi %s451, %s451
        $region323: #{embed_lookup.1} parent=319 // loop_header_branch
          %477 = sbr.rel (%p475) target = $region327
        $region324: #{embed_lookup.1} parent=319 // loop_body
          %v481 = vld [vmem:[%s479] sm:%s472]
          %482 = vst [vmem:[%s480] sm:%s472] %v481
        $region325: #{embed_lookup.1} parent=319 // loop_footer
          %s478 = sadd.s32 1, %s474
        $region326: #{embed_lookup.1} parent=319 // loop_footer_branch
          %473 = sbr.rel target = $region322
        $region327: #{embed_lookup.1} parent=319 // loop_exit
          _
      $region320: #{embed_lookup.1} parent=304 // pred_fallthru
        _
    $region305: #{embed_lookup.1} parent=1 // pred_fallthru
      _
    // Predicated region
    $region306: #{embed_lookup.1} parent=1 // pred_check
      _
    $region307: #{embed_lookup.1} parent=1 // pred_check_branch
      %456 = sbr.rel (0) target = $region309
    $region308: #{embed_lookup.1} parent=1 // pred_region
      %s458 = ssub.s32 2, 1
      loop: start=0, step=1, limit=1
      $region310: #{embed_lookup.1} parent=308 // loop_pre_header
        _
      $region311: #{embed_lookup.1} parent=308 // loop_header
        %s460 = sphi 0, %s464
        %p461 = scmp.ge.s32.totalorder %s460, 1
        %s465 = sphi %s450, %s450
        %s466 = sphi %s451, %s451
      $region312: #{embed_lookup.1} parent=308 // loop_header_branch
        %463 = sbr.rel (%p461) target = $region316
      $region313: #{embed_lookup.1} parent=308 // loop_body
        %v467 = vld [vmem:[%s465] sm:%s458]
        %468 = vst [vmem:[%s466] sm:%s458] %v467
      $region314: #{embed_lookup.1} parent=308 // loop_footer
        %s464 = sadd.s32 1, %s460
      $region315: #{embed_lookup.1} parent=308 // loop_footer_branch
        %459 = sbr.rel target = $region311
      $region316: #{embed_lookup.1} parent=308 // loop_exit
        _
    $region309: #{embed_lookup.1} parent=1 // pred_fallthru
      _
    // Predicated region
    $region328: #{embed_lookup.1} parent=1 // pred_check
      _
    $region329: #{embed_lookup.1} parent=1 // pred_check_branch
      %485 = sbr.rel (0) target = $region331
    $region330: #{embed_lookup.1} parent=1 // pred_region
      %486 = vsyncadd %s452, 16
    $region331: #{embed_lookup.1} parent=1 // pred_fallthru
      _
    %s487 = sadd.s32 %s16, 11
    %s488 = sld [smem:[#allocation4 + %s487]]
    %p489 = scmp.gt.s32.totalorder %s488, 0
    %s490 = scalar_select %p489, %s488, 0
    %p491 = scmp.lt.s32.totalorder %s490, 63
    %s492 = scalar_select %p491, %s490, 63
    %s493 = scalar_lea.vmem %s1, %s492
    %s494 = scalar_lea.vmem [#allocation5], 11
    %s495 = scalar_lea.sflag [#allocation2], 11
    // Predicated region
    $region332: #{embed_lookup.1} parent=1 // pred_check
      _
    $region333: #{embed_lookup.1} parent=1 // pred_check_branch
      %497 = sbr.rel target = $region335
    $region334: #{embed_lookup.1} parent=1 // pred_region
      // Predicated region
      $region347: #{embed_lookup.1} parent=334 // pred_check
        _
      $region348: #{embed_lookup.1} parent=334 // pred_check_branch
        %513 = sbr.rel (0) target = $region350
      $region349: #{embed_lookup.1} parent=334 // pred_region
        %s515 = ssub.s32 2, 1
        loop: start=0, step=1, limit=1
        $region351: #{embed_lookup.1} parent=349 // loop_pre_header
          _
        $region352: #{embed_lookup.1} parent=349 // loop_header
          %s517 = sphi 0, %s521
          %p518 = scmp.ge.s32.totalorder %s517, 1
          %s522 = sphi %s493, %s493
          %s523 = sphi %s494, %s494
        $region353: #{embed_lookup.1} parent=349 // loop_header_branch
          %520 = sbr.rel (%p518) target = $region357
        $region354: #{embed_lookup.1} parent=349 // loop_body
          %v524 = vld [vmem:[%s522] sm:%s515]
          %525 = vst [vmem:[%s523] sm:%s515] %v524
        $region355: #{embed_lookup.1} parent=349 // loop_footer
          %s521 = sadd.s32 1, %s517
        $region356: #{embed_lookup.1} parent=349 // loop_footer_branch
          %516 = sbr.rel target = $region352
        $region357: #{embed_lookup.1} parent=349 // loop_exit
          _
      $region350: #{embed_lookup.1} parent=334 // pred_fallthru
        _
    $region335: #{embed_lookup.1} parent=1 // pred_fallthru
      _
    // Predicated region
    $region336: #{embed_lookup.1} parent=1 // pred_check
      _
    $region337: #{embed_lookup.1} parent=1 // pred_check_branch
      %499 = sbr.rel (0) target = $region339
    $region338: #{embed_lookup.1} parent=1 // pred_region
      %s501 = ssub.s32 2, 1
      loop: start=0, step=1, limit=1
      $region340: #{embed_lookup.1} parent=338 // loop_pre_header
        _
      $region341: #{embed_lookup.1} parent=338 // loop_header
        %s503 = sphi 0, %s507
        %p504 = scmp.ge.s32.totalorder %s503, 1
        %s508 = sphi %s493, %s493
        %s509 = sphi %s494, %s494
      $region342: #{embed_lookup.1} parent=338 // loop_header_branch
        %506 = sbr.rel (%p504) target = $region346
      $region343: #{embed_lookup.1} parent=338 // loop_body
        %v510 = vld [vmem:[%s508] sm:%s501]
        %511 = vst [vmem:[%s509] sm:%s501] %v510
      $region344: #{embed_lookup.1} parent=338 // loop_footer
        %s507 = sadd.s32 1, %s503
      $region345: #{embed_lookup.1} parent=338 // loop_footer_branch
        %502 = sbr.rel target = $region341
      $region346: #{embed_lookup.1} parent=338 // loop_exit
        _
    $region339: #{embed_lookup.1} parent=1 // pred_fallthru
      _
    // Predicated region
    $region358: #{embed_lookup.1} parent=1 // pred_check
      _
    $region359: #{embed_lookup.1} parent=1 // pred_check_branch
      %528 = sbr.rel (0) target = $region361
    $region360: #{embed_lookup.1} parent=1 // pred_region
      %529 = vsyncadd %s495, 16
    $region361: #{embed_lookup.1} parent=1 // pred_fallthru
      _
    %s530 = sadd.s32 %s16, 12
    %s531 = sld [smem:[#allocation4 + %s530]]
    %p532 = scmp.gt.s32.totalorder %s531, 0
    %s533 = scalar_select %p532, %s531, 0
    %p534 = scmp.lt.s32.totalorder %s533, 63
    %s535 = scalar_select %p534, %s533, 63
    %s536 = scalar_lea.vmem %s1, %s535
    %s537 = scalar_lea.vmem [#allocation5], 12
    %s538 = scalar_lea.sflag [#allocation2], 12
    // Predicated region
    $region362: #{embed_lookup.1} parent=1 // pred_check
      _
    $region363: #{embed_lookup.1} parent=1 // pred_check_branch
      %540 = sbr.rel target = $region365
    $region364: #{embed_lookup.1} parent=1 // pred_region
      // Predicated region
      $region377: #{embed_lookup.1} parent=364 // pred_check
        _
      $region378: #{embed_lookup.1} parent=364 // pred_check_branch
        %556 = sbr.rel (0) target = $region380
      $region379: #{embed_lookup.1} parent=364 // pred_region
        %s558 = ssub.s32 2, 1
        loop: start=0, step=1, limit=1
        $region381: #{embed_lookup.1} parent=379 // loop_pre_header
          _
        $region382: #{embed_lookup.1} parent=379 // loop_header
          %s560 = sphi 0, %s564
          %p561 = scmp.ge.s32.totalorder %s560, 1
          %s565 = sphi %s536, %s536
          %s566 = sphi %s537, %s537
        $region383: #{embed_lookup.1} parent=379 // loop_header_branch
          %563 = sbr.rel (%p561) target = $region387
        $region384: #{embed_lookup.1} parent=379 // loop_body
          %v567 = vld [vmem:[%s565] sm:%s558]
          %568 = vst [vmem:[%s566] sm:%s558] %v567
        $region385: #{embed_lookup.1} parent=379 // loop_footer
          %s564 = sadd.s32 1, %s560
        $region386: #{embed_lookup.1} parent=379 // loop_footer_branch
          %559 = sbr.rel target = $region382
        $region387: #{embed_lookup.1} parent=379 // loop_exit
          _
      $region380: #{embed_lookup.1} parent=364 // pred_fallthru
        _
    $region365: #{embed_lookup.1} parent=1 // pred_fallthru
      _
    // Predicated region
    $region366: #{embed_lookup.1} parent=1 // pred_check
      _
    $region367: #{embed_lookup.1} parent=1 // pred_check_branch
      %542 = sbr.rel (0) target = $region369
    $region368: #{embed_lookup.1} parent=1 // pred_region
      %s544 = ssub.s32 2, 1
      loop: start=0, step=1, limit=1
      $region370: #{embed_lookup.1} parent=368 // loop_pre_header
        _
      $region371: #{embed_lookup.1} parent=368 // loop_header
        %s546 = sphi 0, %s550
        %p547 = scmp.ge.s32.totalorder %s546, 1
        %s551 = sphi %s536, %s536
        %s552 = sphi %s537, %s537
      $region372: #{embed_lookup.1} parent=368 // loop_header_branch
        %549 = sbr.rel (%p547) target = $region376
      $region373: #{embed_lookup.1} parent=368 // loop_body
        %v553 = vld [vmem:[%s551] sm:%s544]
        %554 = vst [vmem:[%s552] sm:%s544] %v553
      $region374: #{embed_lookup.1} parent=368 // loop_footer
        %s550 = sadd.s32 1, %s546
      $region375: #{embed_lookup.1} parent=368 // loop_footer_branch
        %545 = sbr.rel target = $region371
      $region376: #{embed_lookup.1} parent=368 // loop_exit
        _
    $region369: #{embed_lookup.1} parent=1 // pred_fallthru
      _
    // Predicated region
    $region388: #{embed_lookup.1} parent=1 // pred_check
      _
    $region389: #{embed_lookup.1} parent=1 // pred_check_branch
      %571 = sbr.rel (0) target = $region391
    $region390: #{embed_lookup.1} parent=1 // pred_region
      %572 = vsyncadd %s538, 16
    $region391: #{embed_lookup.1} parent=1 // pred_fallthru
      _
    %s573 = sadd.s32 %s16, 13
    %s574 = sld [smem:[#allocation4 + %s573]]
    %p575 = scmp.gt.s32.totalorder %s574, 0
    %s576 = scalar_select %p575, %s574, 0
    %p577 = scmp.lt.s32.totalorder %s576, 63
    %s578 = scalar_select %p577, %s576, 63
    %s579 = scalar_lea.vmem %s1, %s578
    %s580 = scalar_lea.vmem [#allocation5], 13
    %s581 = scalar_lea.sflag [#allocation2], 13
    // Predicated region
    $region392: #{embed_lookup.1} parent=1 // pred_check
      _
    $region393: #{embed_lookup.1} parent=1 // pred_check_branch
      %583 = sbr.rel target = $region395
    $region394: #{embed_lookup.1} parent=1 // pred_region
      // Predicated region
      $region407: #{embed_lookup.1} parent=394 // pred_check
        _
      $region408: #{embed_lookup.1} parent=394 // pred_check_branch
        %599 = sbr.rel (0) target = $region410
      $region409: #{embed_lookup.1} parent=394 // pred_region
        %s601 = ssub.s32 2, 1
        loop: start=0, step=1, limit=1
        $region411: #{embed_lookup.1} parent=409 // loop_pre_header
          _
        $region412: #{embed_lookup.1} parent=409 // loop_header
          %s603 = sphi 0, %s607
          %p604 = scmp.ge.s32.totalorder %s603, 1
          %s608 = sphi %s579, %s579
          %s609 = sphi %s580, %s580
        $region413: #{embed_lookup.1} parent=409 // loop_header_branch
          %606 = sbr.rel (%p604) target = $region417
        $region414: #{embed_lookup.1} parent=409 // loop_body
          %v610 = vld [vmem:[%s608] sm:%s601]
          %611 = vst [vmem:[%s609] sm:%s601] %v610
        $region415: #{embed_lookup.1} parent=409 // loop_footer
          %s607 = sadd.s32 1, %s603
        $region416: #{embed_lookup.1} parent=409 // loop_footer_branch
          %602 = sbr.rel target = $region412
        $region417: #{embed_lookup.1} parent=409 // loop_exit
          _
      $region410: #{embed_lookup.1} parent=394 // pred_fallthru
        _
    $region395: #{embed_lookup.1} parent=1 // pred_fallthru
      _
    // Predicated region
    $region396: #{embed_lookup.1} parent=1 // pred_check
      _
    $region397: #{embed_lookup.1} parent=1 // pred_check_branch
      %585 = sbr.rel (0) target = $region399
    $region398: #{embed_lookup.1} parent=1 // pred_region
      %s587 = ssub.s32 2, 1
      loop: start=0, step=1, limit=1
      $region400: #{embed_lookup.1} parent=398 // loop_pre_header
        _
      $region401: #{embed_lookup.1} parent=398 // loop_header
        %s589 = sphi 0, %s593
        %p590 = scmp.ge.s32.totalorder %s589, 1
        %s594 = sphi %s579, %s579
        %s595 = sphi %s580, %s580
      $region402: #{embed_lookup.1} parent=398 // loop_header_branch
        %592 = sbr.rel (%p590) target = $region406
      $region403: #{embed_lookup.1} parent=398 // loop_body
        %v596 = vld [vmem:[%s594] sm:%s587]
        %597 = vst [vmem:[%s595] sm:%s587] %v596
      $region404: #{embed_lookup.1} parent=398 // loop_footer
        %s593 = sadd.s32 1, %s589
      $region405: #{embed_lookup.1} parent=398 // loop_footer_branch
        %588 = sbr.rel target = $region401
      $region406: #{embed_lookup.1} parent=398 // loop_exit
        _
    $region399: #{embed_lookup.1} parent=1 // pred_fallthru
      _
    // Predicated region
    $region418: #{embed_lookup.1} parent=1 // pred_check
      _
    $region419: #{embed_lookup.1} parent=1 // pred_check_branch
      %614 = sbr.rel (0) target = $region421
    $region420: #{embed_lookup.1} parent=1 // pred_region
      %615 = vsyncadd %s581, 16
    $region421: #{embed_lookup.1} parent=1 // pred_fallthru
      _
    %s616 = sadd.s32 %s16, 14
    %s617 = sld [smem:[#allocation4 + %s616]]
    %p618 = scmp.gt.s32.totalorder %s617, 0
    %s619 = scalar_select %p618, %s617, 0
    %p620 = scmp.lt.s32.totalorder %s619, 63
    %s621 = scalar_select %p620, %s619, 63
    %s622 = scalar_lea.vmem %s1, %s621
    %s623 = scalar_lea.vmem [#allocation5], 14
    %s624 = scalar_lea.sflag [#allocation2], 14
    // Predicated region
    $region422: #{embed_lookup.1} parent=1 // pred_check
      _
    $region423: #{embed_lookup.1} parent=1 // pred_check_branch
      %626 = sbr.rel target = $region425
    $region424: #{embed_lookup.1} parent=1 // pred_region
      // Predicated region
      $region437: #{embed_lookup.1} parent=424 // pred_check
        _
      $region438: #{embed_lookup.1} parent=424 // pred_check_branch
        %642 = sbr.rel (0) target = $region440
      $region439: #{embed_lookup.1} parent=424 // pred_region
        %s644 = ssub.s32 2, 1
        loop: start=0, step=1, limit=1
        $region441: #{embed_lookup.1} parent=439 // loop_pre_header
          _
        $region442: #{embed_lookup.1} parent=439 // loop_header
          %s646 = sphi 0, %s650
          %p647 = scmp.ge.s32.totalorder %s646, 1
          %s651 = sphi %s622, %s622
          %s652 = sphi %s623, %s623
        $region443: #{embed_lookup.1} parent=439 // loop_header_branch
          %649 = sbr.rel (%p647) target = $region447
        $region444: #{embed_lookup.1} parent=439 // loop_body
          %v653 = vld [vmem:[%s651] sm:%s644]
          %654 = vst [vmem:[%s652] sm:%s644] %v653
        $region445: #{embed_lookup.1} parent=439 // loop_footer
          %s650 = sadd.s32 1, %s646
        $region446: #{embed_lookup.1} parent=439 // loop_footer_branch
          %645 = sbr.rel target = $region442
        $region447: #{embed_lookup.1} parent=439 // loop_exit
          _
      $region440: #{embed_lookup.1} parent=424 // pred_fallthru
        _
    $region425: #{embed_lookup.1} parent=1 // pred_fallthru
      _
    // Predicated region
    $region426: #{embed_lookup.1} parent=1 // pred_check
      _
    $region427: #{embed_lookup.1} parent=1 // pred_check_branch
      %628 = sbr.rel (0) target = $region429
    $region428: #{embed_lookup.1} parent=1 // pred_region
      %s630 = ssub.s32 2, 1
      loop: start=0, step=1, limit=1
      $region430: #{embed_lookup.1} parent=428 // loop_pre_header
        _
      $region431: #{embed_lookup.1} parent=428 // loop_header
        %s632 = sphi 0, %s636
        %p633 = scmp.ge.s32.totalorder %s632, 1
        %s637 = sphi %s622, %s622
        %s638 = sphi %s623, %s623
      $region432: #{embed_lookup.1} parent=428 // loop_header_branch
        %635 = sbr.rel (%p633) target = $region436
      $region433: #{embed_lookup.1} parent=428 // loop_body
        %v639 = vld [vmem:[%s637] sm:%s630]
        %640 = vst [vmem:[%s638] sm:%s630] %v639
      $region434: #{embed_lookup.1} parent=428 // loop_footer
        %s636 = sadd.s32 1, %s632
      $region435: #{embed_lookup.1} parent=428 // loop_footer_branch
        %631 = sbr.rel target = $region431
      $region436: #{embed_lookup.1} parent=428 // loop_exit
        _
    $region429: #{embed_lookup.1} parent=1 // pred_fallthru
      _
    // Predicated region
    $region448: #{embed_lookup.1} parent=1 // pred_check
      _
    $region449: #{embed_lookup.1} parent=1 // pred_check_branch
      %657 = sbr.rel (0) target = $region451
    $region450: #{embed_lookup.1} parent=1 // pred_region
      %658 = vsyncadd %s624, 16
    $region451: #{embed_lookup.1} parent=1 // pred_fallthru
      _
    %s659 = sadd.s32 %s16, 15
    %s660 = sld [smem:[#allocation4 + %s659]]
    %p661 = scmp.gt.s32.totalorder %s660, 0
    %s662 = scalar_select %p661, %s660, 0
    %p663 = scmp.lt.s32.totalorder %s662, 63
    %s664 = scalar_select %p663, %s662, 63
    %s665 = scalar_lea.vmem %s1, %s664
    %s666 = scalar_lea.vmem [#allocation5], 15
    %s667 = scalar_lea.sflag [#allocation2], 15
    // Predicated region
    $region452: #{embed_lookup.1} parent=1 // pred_check
      _
    $region453: #{embed_lookup.1} parent=1 // pred_check_branch
      %669 = sbr.rel target = $region455
    $region454: #{embed_lookup.1} parent=1 // pred_region
      // Predicated region
      $region467: #{embed_lookup.1} parent=454 // pred_check
        _
      $region468: #{embed_lookup.1} parent=454 // pred_check_branch
        %685 = sbr.rel (0) target = $region470
      $region469: #{embed_lookup.1} parent=454 // pred_region
        %s687 = ssub.s32 2, 1
        loop: start=0, step=1, limit=1
        $region471: #{embed_lookup.1} parent=469 // loop_pre_header
          _
        $region472: #{embed_lookup.1} parent=469 // loop_header
          %s689 = sphi 0, %s693
          %p690 = scmp.ge.s32.totalorder %s689, 1
          %s694 = sphi %s665, %s665
          %s695 = sphi %s666, %s666
        $region473: #{embed_lookup.1} parent=469 // loop_header_branch
          %692 = sbr.rel (%p690) target = $region477
        $region474: #{embed_lookup.1} parent=469 // loop_body
          %v696 = vld [vmem:[%s694] sm:%s687]
          %697 = vst [vmem:[%s695] sm:%s687] %v696
        $region475: #{embed_lookup.1} parent=469 // loop_footer
          %s693 = sadd.s32 1, %s689
        $region476: #{embed_lookup.1} parent=469 // loop_footer_branch
          %688 = sbr.rel target = $region472
        $region477: #{embed_lookup.1} parent=469 // loop_exit
          _
      $region470: #{embed_lookup.1} parent=454 // pred_fallthru
        _
    $region455: #{embed_lookup.1} parent=1 // pred_fallthru
      _
    // Predicated region
    $region456: #{embed_lookup.1} parent=1 // pred_check
      _
    $region457: #{embed_lookup.1} parent=1 // pred_check_branch
      %671 = sbr.rel (0) target = $region459
    $region458: #{embed_lookup.1} parent=1 // pred_region
      %s673 = ssub.s32 2, 1
      loop: start=0, step=1, limit=1
      $region460: #{embed_lookup.1} parent=458 // loop_pre_header
        _
      $region461: #{embed_lookup.1} parent=458 // loop_header
        %s675 = sphi 0, %s679
        %p676 = scmp.ge.s32.totalorder %s675, 1
        %s680 = sphi %s665, %s665
        %s681 = sphi %s666, %s666
      $region462: #{embed_lookup.1} parent=458 // loop_header_branch
        %678 = sbr.rel (%p676) target = $region466
      $region463: #{embed_lookup.1} parent=458 // loop_body
        %v682 = vld [vmem:[%s680] sm:%s673]
        %683 = vst [vmem:[%s681] sm:%s673] %v682
      $region464: #{embed_lookup.1} parent=458 // loop_footer
        %s679 = sadd.s32 1, %s675
      $region465: #{embed_lookup.1} parent=458 // loop_footer_branch
        %674 = sbr.rel target = $region461
      $region466: #{embed_lookup.1} parent=458 // loop_exit
        _
    $region459: #{embed_lookup.1} parent=1 // pred_fallthru
      _
    // Predicated region
    $region478: #{embed_lookup.1} parent=1 // pred_check
      _
    $region479: #{embed_lookup.1} parent=1 // pred_check_branch
      %700 = sbr.rel (0) target = $region481
    $region480: #{embed_lookup.1} parent=1 // pred_region
      %701 = vsyncadd %s667, 16
    $region481: #{embed_lookup.1} parent=1 // pred_fallthru
      _
    %s702 = smul.u32 1, 1
    %s703 = sshll.u32 %s702, 4
    %704 = dma.done [#allocation2], %s703
    %s705 = sshll.u32 %s702, 4
    %706 = dma.done %s65, %s705
    %s707 = sshll.u32 %s702, 4
    %708 = dma.done %s108, %s707
    %s709 = sshll.u32 %s702, 4
    %710 = dma.done %s151, %s709
    %s711 = sshll.u32 %s702, 4
    %712 = dma.done %s194, %s711
    %s713 = sshll.u32 %s702, 4
    %714 = dma.done %s237, %s713
    %s715 = sshll.u32 %s702, 4
    %716 = dma.done %s280, %s715
    %s717 = sshll.u32 %s702, 4
    %718 = dma.done %s323, %s717
    %s719 = sshll.u32 %s702, 4
    %720 = dma.done %s366, %s719
    %s721 = sshll.u32 %s702, 4
    %722 = dma.done %s409, %s721
    %s723 = sshll.u32 %s702, 4
    %724 = dma.done %s452, %s723
    %s725 = sshll.u32 %s702, 4
    %726 = dma.done %s495, %s725
    %s727 = sshll.u32 %s702, 4
    %728 = dma.done %s538, %s727
    %s729 = sshll.u32 %s702, 4
    %730 = dma.done %s581, %s729
    %s731 = sshll.u32 %s702, 4
    %732 = dma.done %s624, %s731
    %s733 = sshll.u32 %s702, 4
    %734 = dma.done %s667, %s733
    // Predicated region
    $region482: #{embed_lookup.1} parent=1 // pred_check
      _
    $region483: #{embed_lookup.1} parent=1 // pred_check_branch
      %736 = sbr.rel (0) target = $region485
    $region484: #{embed_lookup.1} parent=1 // pred_region
      %738 = vsyncadd [#allocation6], 0
      %s739 = sshll.u32 [#allocation5], 4
      %s740 = int_to_ptr.vmem [resolvable:$true] %s739
      %s741 = sshll.u32 %s2, 4
      %s742 = int_to_ptr.hbm [resolvable:$true] %s741
      %747 = dma.vmem_to_hbm [thread:$0]  %s740, 256, %s742, [#allocation6], 128, 128, 8
    $region485: #{embed_lookup.1} parent=1 // pred_fallthru
      _
    // Predicated region
    $region486: #{embed_lookup.1} parent=1 // pred_check
      _
    $region487: #{embed_lookup.1} parent=1 // pred_check_branch
      %749 = sbr.rel (0) target = $region489
    $region488: #{embed_lookup.1} parent=1 // pred_region
      %751 = dma.done [#allocation6], 256
    $region489: #{embed_lookup.1} parent=1 // pred_fallthru
      _
    %752 = vsyncpa [#allocation6], 1
  %753 = vsyncmov [#allocation2]
  %s754 = vpop.sfrf %753
  %p755 = scmp.eq.s32.totalorder %s754, 0
  %p756 = pneg %p755
  %758 = shalt.err (%p756)
  %s759 = scalar_lea.sflag [#allocation2], 1
  %760 = vsyncmov %s759
  %s761 = vpop.sfrf %760
  %p762 = scmp.eq.s32.totalorder %s761, 0
  %p763 = pneg %p762
  %765 = shalt.err (%p763)
  %s766 = scalar_lea.sflag [#allocation2], 2
  %767 = vsyncmov %s766
  %s768 = vpop.sfrf %767
  %p769 = scmp.eq.s32.totalorder %s768, 0
  %p770 = pneg %p769
  %772 = shalt.err (%p770)
  %s773 = scalar_lea.sflag [#allocation2], 3
  %774 = vsyncmov %s773
  %s775 = vpop.sfrf %774
  %p776 = scmp.eq.s32.totalorder %s775, 0
  %p777 = pneg %p776
  %779 = shalt.err (%p777)
  %s780 = scalar_lea.sflag [#allocation2], 4
  %781 = vsyncmov %s780
  %s782 = vpop.sfrf %781
  %p783 = scmp.eq.s32.totalorder %s782, 0
  %p784 = pneg %p783
  %786 = shalt.err (%p784)
  %s787 = scalar_lea.sflag [#allocation2], 5
  %788 = vsyncmov %s787
  %s789 = vpop.sfrf %788
  %p790 = scmp.eq.s32.totalorder %s789, 0
  %p791 = pneg %p790
  %793 = shalt.err (%p791)
  %s794 = scalar_lea.sflag [#allocation2], 6
  %795 = vsyncmov %s794
  %s796 = vpop.sfrf %795
  %p797 = scmp.eq.s32.totalorder %s796, 0
  %p798 = pneg %p797
  %800 = shalt.err (%p798)
  %s801 = scalar_lea.sflag [#allocation2], 7
  %802 = vsyncmov %s801
  %s803 = vpop.sfrf %802
  %p804 = scmp.eq.s32.totalorder %s803, 0
  %p805 = pneg %p804
  %807 = shalt.err (%p805)
  %s808 = scalar_lea.sflag [#allocation2], 8
  %809 = vsyncmov %s808
  %s810 = vpop.sfrf %809
  %p811 = scmp.eq.s32.totalorder %s810, 0
  %p812 = pneg %p811
  %814 = shalt.err (%p812)
  %s815 = scalar_lea.sflag [#allocation2], 9
  %816 = vsyncmov %s815
  %s817 = vpop.sfrf %816
  %p818 = scmp.eq.s32.totalorder %s817, 0
  %p819 = pneg %p818
  %821 = shalt.err (%p819)
  %s822 = scalar_lea.sflag [#allocation2], 10
  %823 = vsyncmov %s822
  %s824 = vpop.sfrf %823
  %p825 = scmp.eq.s32.totalorder %s824, 0
  %p826 = pneg %p825
  %828 = shalt.err (%p826)
  %s829 = scalar_lea.sflag [#allocation2], 11
  %830 = vsyncmov %s829
  %s831 = vpop.sfrf %830
  %p832 = scmp.eq.s32.totalorder %s831, 0
  %p833 = pneg %p832
  %835 = shalt.err (%p833)
  %s836 = scalar_lea.sflag [#allocation2], 12
  %837 = vsyncmov %s836
  %s838 = vpop.sfrf %837
  %p839 = scmp.eq.s32.totalorder %s838, 0
  %p840 = pneg %p839
  %842 = shalt.err (%p840)
  %s843 = scalar_lea.sflag [#allocation2], 13
  %844 = vsyncmov %s843
  %s845 = vpop.sfrf %844
  %p846 = scmp.eq.s32.totalorder %s845, 0
  %p847 = pneg %p846
  %849 = shalt.err (%p847)
  %s850 = scalar_lea.sflag [#allocation2], 14
  %851 = vsyncmov %s850
  %s852 = vpop.sfrf %851
  %p853 = scmp.eq.s32.totalorder %s852, 0
  %p854 = pneg %p853
  %856 = shalt.err (%p854)
  %s857 = scalar_lea.sflag [#allocation2], 15
  %858 = vsyncmov %s857
  %s859 = vpop.sfrf %858
  %p860 = scmp.eq.s32.totalorder %s859, 0
  %p861 = pneg %p860
  %863 = shalt.err (%p861)

</llo_original>
